<compile_context>
chip_gen: v5e
topology: v5e:2x2
jax: 0.10.0
libtpu: 0.0.40
codegen_flags: <defaults>
</compile_context>

<pallas_src>
import jax
import jax.numpy as jnp
from jax.experimental import pallas as pl
from jax.experimental.pallas import tpu as pltpu


def lstm_sales_kernel(x_ref,             # (B, T*D)  f32 (batch-first, t-major per row)
                      wih0_ref,          # (D, 4H)   f32  (g-cols pre-scaled by 2)
                      whh0_ref,          # (H, 4H)   bf16 (g-cols pre-scaled by 2)
                      b0_ref,            # (1, 4H)   f32  (g-part pre-scaled by 2)
                      w1_ref,            # (2H, 4H)  bf16 stacked [wih1; whh1], g-cols *2
                      b1_ref,            # (1, 4H)   f32  (g-part pre-scaled by 2)
                      wfc_ref,           # (1, H)    f32
                      bfc_ref,           # (1, 1)    f32
                      out_ref):          # (B, 1)    f32
    B = out_ref.shape[0]
    H = whh0_ref.shape[0]
    D = wih0_ref.shape[0]
    T = x_ref.shape[1] // D

    # Hoist every weight / bias load (and their sublane broadcasts) out of the
    # recurrence -- loaded exactly once.
    x = x_ref[...]
    whh0 = whh0_ref[...]
    w1 = w1_ref[...]
    wfc = wfc_ref[...]
    bfc = bfc_ref[...]
    b0 = jnp.broadcast_to(b0_ref[...], (B, 4 * H))
    b1 = jnp.broadcast_to(b1_ref[...], (B, 4 * H))
    wih0_rows = [jnp.broadcast_to(wih0_ref[d:d + 1, :], (B, 4 * H))
                 for d in range(D)]

    def gates_to_hc(gates, c):
        # PyTorch gate order: i, f, g, o.  The g-gate columns of the
        # weights/bias were pre-scaled by 2 offline, so ONE full-width
        # sigmoid yields everything: tanh(z) == 2*sigmoid(2z) - 1.
        sig = jax.nn.sigmoid(gates)
        i = sig[:, 0 * H:1 * H]
        f = sig[:, 1 * H:2 * H]
        g = 2.0 * sig[:, 2 * H:3 * H] - 1.0
        o = sig[:, 3 * H:4 * H]
        c_new = f * c + i * g
        h_new = o * jnp.tanh(c_new)
        return h_new, c_new

    # Recurrent state lives in registers (values), not VMEM scratch.
    zeros_f = jnp.zeros((B, H), jnp.float32)
    c0, c1, h1f = zeros_f, zeros_f, zeros_f
    h0_b = jnp.zeros((B, H), jnp.bfloat16)   # bf16 copy fed to the MXU

    # T is static and tiny: fully unroll so the scheduler can overlap the
    # state-independent layer-0 input FMAs of step t+1 with layer-1 MXU/EUP
    # work of step t.
    for t in range(T):
        # ---- layer 0 -----------------------------------------------------
        # input projection: D (=2) VPU broadcast-FMAs, off the MXU.
        xproj = b0
        for d in range(D):
            col = t * D + d
            xproj = xproj + x[:, col:col + 1] * wih0_rows[d]
        g0 = xproj + jnp.dot(h0_b, whh0, preferred_element_type=jnp.float32)
        h0f, c0 = gates_to_hc(g0, c0)
        h0_b = h0f.astype(jnp.bfloat16)

        # ---- layer 1: single fused dot over stacked [wih1; whh1] ----------
        h01 = jnp.concatenate([h0f, h1f], axis=-1).astype(jnp.bfloat16)
        g1 = jnp.dot(h01, w1, preferred_element_type=jnp.float32) + b1
        h1f, c1 = gates_to_hc(g1, c1)

    # fc(out[:, -1, :]): elementwise multiply + lane reduction (VPU/XLU)
    # instead of a lane-width-1 MXU matmul in the epilogue.
    y = jnp.sum(h1f * wfc, axis=-1, keepdims=True) + bfc
    out_ref[...] = y.astype(out_ref.dtype)


def lstm_sales_forward(x, kparams):
    """x: (B, T, D) float32  ->  (B,) float32"""
    B, T, D = x.shape
    # Free reshape of the native batch-first layout (no transpose, no copy).
    x2 = x.reshape(B, T * D)
    args = (x2,
            kparams["wih0"], kparams["whh0"], kparams["b0"],
            kparams["w1"], kparams["b1"],
            kparams["wfc"], kparams["bfc"])
    out = pl.pallas_call(
        lstm_sales_kernel,
        out_shape=jax.ShapeDtypeStruct((B, 1), jnp.float32),
        in_specs=[pl.BlockSpec(memory_space=pltpu.MemorySpace.VMEM)] * len(args),
        out_specs=pl.BlockSpec(memory_space=pltpu.MemorySpace.VMEM),
    )(*args)
    return out[:, 0]   # squeeze(-1)


def init_params(key, input_dim=2, hidden=32):
    """Raw parameters with nn.LSTM / nn.Linear shapes and init distribution."""
    H = hidden
    k = 1.0 / jnp.sqrt(jnp.float32(H))
    keys = jax.random.split(key, 10)
    u = lambda kk, shp: jax.random.uniform(kk, shp, jnp.float32, -k, k)
    return dict(
        w_ih0=u(keys[0], (4 * H, input_dim)), w_hh0=u(keys[1], (4 * H, H)),
        b_ih0=u(keys[2], (4 * H,)), b_hh0=u(keys[3], (4 * H,)),
        w_ih1=u(keys[4], (4 * H, H)), w_hh1=u(keys[5], (4 * H, H)),
        b_ih1=u(keys[6], (4 * H,)), b_hh1=u(keys[7], (4 * H,)),
        w_fc=u(keys[8], (1, H)), b_fc=u(keys[9], (1,)),
    )


def prepare_kernel_params(raw):
    """One-time offline transform of raw PyTorch-style weights into the
    kernel layout:
      * transpose to (in, 4H) so gates = z @ W,
      * combine b_ih + b_hh,
      * pre-scale the g-gate columns by 2 (tanh-via-single-sigmoid trick),
      * stack layer-1's [wih1; whh1] into one (2H, 4H) weight (fused dot),
      * cast recurrent MXU weights to bf16 (f32 accumulation in-kernel)."""
    H = raw["w_hh0"].shape[1]
    g_scale = jnp.concatenate([
        jnp.ones((2 * H,), jnp.float32),
        jnp.full((H,), 2.0, jnp.float32),
        jnp.ones((H,), jnp.float32)])                          # (4H,)
    wih0 = raw["w_ih0"].T * g_scale                             # (D, 4H) f32
    whh0 = (raw["w_hh0"].T * g_scale).astype(jnp.bfloat16)      # (H, 4H)
    b0 = ((raw["b_ih0"] + raw["b_hh0"]) * g_scale)[None, :]     # (1, 4H)
    w1 = (jnp.concatenate([raw["w_ih1"].T, raw["w_hh1"].T], axis=0)
          * g_scale).astype(jnp.bfloat16)                       # (2H, 4H)
    b1 = ((raw["b_ih1"] + raw["b_hh1"]) * g_scale)[None, :]     # (1, 4H)
    return dict(wih0=wih0, whh0=whh0, b0=b0, w1=w1, b1=b1,
                wfc=raw["w_fc"], bfc=raw["b_fc"][None, :])


def reference_forward(x, raw):
    """Pure-JAX f32 reference of nn.LSTM(2 layers, batch_first) + fc."""
    B, T, D = x.shape
    H = raw["w_hh0"].shape[1]

    def cell(z, h, c, w_ih, w_hh, b_ih, b_hh):
        gates = z @ w_ih.T + h @ w_hh.T + b_ih + b_hh
        i = jax.nn.sigmoid(gates[:, 0 * H:1 * H])
        f = jax.nn.sigmoid(gates[:, 1 * H:2 * H])
        g = jnp.tanh(gates[:, 2 * H:3 * H])
        o = jax.nn.sigmoid(gates[:, 3 * H:4 * H])
        c_new = f * c + i * g
        return o * jnp.tanh(c_new), c_new

    h0 = c0 = h1 = c1 = jnp.zeros((B, H), jnp.float32)
    for t in range(T):
        h0, c0 = cell(x[:, t, :], h0, c0,
                      raw["w_ih0"], raw["w_hh0"], raw["b_ih0"], raw["b_hh0"])
        h1, c1 = cell(h0, h1, c1,
                      raw["w_ih1"], raw["w_hh1"], raw["b_ih1"], raw["b_hh1"])
    return (h1 @ raw["w_fc"].T + raw["b_fc"])[:, 0]


if __name__ == "__main__":
    B, T, D, H = 2, 8, 2, 32
    key = jax.random.PRNGKey(0)
    kx, kp = jax.random.split(key)

    x = jax.random.normal(kx, (B, T, D), jnp.float32)
    raw = init_params(kp, input_dim=D, hidden=H)
    kparams = prepare_kernel_params(raw)

    out = lstm_sales_forward(x, kparams)
    out = jax.block_until_ready(out)

    ref = reference_forward(x, raw)
    assert out.shape == (B,)
    # bf16 MXU inputs (f32 accumulation) -> slightly looser tolerance vs the
    # pure-f32 reference.
    assert jnp.allclose(out, ref, atol=2e-2, rtol=2e-2), (out, ref)

    print("KERNEL_OK")
</pallas_src>

<mosaic_0001>
module attributes {stable_mosaic.version = 11 : i64} {
  func.func @lstm_sales_kernel(%arg0: memref<2x16xf32, #tpu.memory_space<vmem>>, %arg1: memref<2x128xf32, #tpu.memory_space<vmem>>, %arg2: memref<32x128xbf16, #tpu.memory_space<vmem>>, %arg3: memref<1x128xf32, #tpu.memory_space<vmem>>, %arg4: memref<64x128xbf16, #tpu.memory_space<vmem>>, %arg5: memref<1x128xf32, #tpu.memory_space<vmem>>, %arg6: memref<1x32xf32, #tpu.memory_space<vmem>>, %arg7: memref<1x1xf32, #tpu.memory_space<vmem>>, %arg8: memref<2x1xf32, #tpu.memory_space<vmem>>) attributes {dimension_semantics = [], scalar_prefetch = 0 : i64, scratch_operands = 0 : i64, tpu.core_type = #tpu.core_type<tc>} {
    %c0 = arith.constant 0 : index
    %c0_0 = arith.constant 0 : index
    %0 = vector.load %arg0[%c0, %c0_0] : memref<2x16xf32, #tpu.memory_space<vmem>>, vector<2x16xf32>
    %c0_1 = arith.constant 0 : index
    %c0_2 = arith.constant 0 : index
    %1 = vector.load %arg2[%c0_1, %c0_2] : memref<32x128xbf16, #tpu.memory_space<vmem>>, vector<32x128xbf16>
    %c0_3 = arith.constant 0 : index
    %c0_4 = arith.constant 0 : index
    %2 = vector.load %arg4[%c0_3, %c0_4] : memref<64x128xbf16, #tpu.memory_space<vmem>>, vector<64x128xbf16>
    %c0_5 = arith.constant 0 : index
    %c0_6 = arith.constant 0 : index
    %3 = vector.load %arg6[%c0_5, %c0_6] : memref<1x32xf32, #tpu.memory_space<vmem>>, vector<1x32xf32>
    %c0_7 = arith.constant 0 : index
    %c0_8 = arith.constant 0 : index
    %4 = vector.load %arg7[%c0_7, %c0_8] : memref<1x1xf32, #tpu.memory_space<vmem>>, vector<1x1xf32>
    %c0_9 = arith.constant 0 : index
    %c0_10 = arith.constant 0 : index
    %5 = vector.load %arg3[%c0_9, %c0_10] : memref<1x128xf32, #tpu.memory_space<vmem>>, vector<1x128xf32>
    %6 = vector.shape_cast %5 : vector<1x128xf32> to vector<1x128xf32>
    %7 = vector.broadcast %6 : vector<1x128xf32> to vector<2x128xf32>
    %c0_11 = arith.constant 0 : index
    %c0_12 = arith.constant 0 : index
    %8 = vector.load %arg5[%c0_11, %c0_12] : memref<1x128xf32, #tpu.memory_space<vmem>>, vector<1x128xf32>
    %9 = vector.shape_cast %8 : vector<1x128xf32> to vector<1x128xf32>
    %10 = vector.broadcast %9 : vector<1x128xf32> to vector<2x128xf32>
    %c0_13 = arith.constant 0 : index
    %c0_14 = arith.constant 0 : index
    %11 = vector.load %arg1[%c0_13, %c0_14] : memref<2x128xf32, #tpu.memory_space<vmem>>, vector<1x128xf32>
    %12 = vector.shape_cast %11 : vector<1x128xf32> to vector<1x128xf32>
    %13 = vector.broadcast %12 : vector<1x128xf32> to vector<2x128xf32>
    %c1 = arith.constant 1 : index
    %c0_15 = arith.constant 0 : index
    %14 = vector.load %arg1[%c1, %c0_15] : memref<2x128xf32, #tpu.memory_space<vmem>>, vector<1x128xf32>
    %15 = vector.shape_cast %14 : vector<1x128xf32> to vector<1x128xf32>
    %16 = vector.broadcast %15 : vector<1x128xf32> to vector<2x128xf32>
    %cst = arith.constant 0.000000e+00 : f32
    %17 = vector.broadcast %cst : f32 to vector<2x32xf32>
    %cst_16 = arith.constant 0.000000e+00 : bf16
    %18 = vector.broadcast %cst_16 : bf16 to vector<2x32xbf16>
    %19 = vector.extract_strided_slice %0 {offsets = [0, 0], sizes = [2, 1], strides = [1, 1]} : vector<2x16xf32> to vector<2x1xf32>
    %20 = vector.broadcast %19 : vector<2x1xf32> to vector<2x128xf32>
    %21 = arith.mulf %20, %13 : vector<2x128xf32>
    %22 = arith.addf %7, %21 : vector<2x128xf32>
    %23 = vector.extract_strided_slice %0 {offsets = [0, 1], sizes = [2, 1], strides = [1, 1]} : vector<2x16xf32> to vector<2x1xf32>
    %24 = vector.broadcast %23 : vector<2x1xf32> to vector<2x128xf32>
    %25 = arith.mulf %24, %16 : vector<2x128xf32>
    %26 = arith.addf %22, %25 : vector<2x128xf32>
    %cst_17 = arith.constant dense<0.000000e+00> : vector<2x128xf32>
    %27 = tpu.matmul %18, %1, %cst_17 {dimension_numbers = #tpu.dot_dimension_numbers<[1], [0], [0], [1], [0, 0, 1, 1], [], []>} : vector<2x32xbf16>, vector<32x128xbf16>, vector<2x128xf32> -> vector<2x128xf32>
    %28 = arith.addf %26, %27 : vector<2x128xf32>
    %29 = arith.negf %28 : vector<2x128xf32>
    %30 = math.exp %29 : vector<2x128xf32>
    %cst_18 = arith.constant 1.000000e+00 : f32
    %31 = vector.broadcast %cst_18 : f32 to vector<2x128xf32>
    %32 = arith.addf %31, %30 : vector<2x128xf32>
    %33 = arith.divf %31, %32 : vector<2x128xf32>
    %34 = vector.extract_strided_slice %33 {offsets = [0, 0], sizes = [2, 32], strides = [1, 1]} : vector<2x128xf32> to vector<2x32xf32>
    %35 = vector.extract_strided_slice %33 {offsets = [0, 32], sizes = [2, 32], strides = [1, 1]} : vector<2x128xf32> to vector<2x32xf32>
    %36 = vector.extract_strided_slice %33 {offsets = [0, 64], sizes = [2, 32], strides = [1, 1]} : vector<2x128xf32> to vector<2x32xf32>
    %cst_19 = arith.constant 2.000000e+00 : f32
    %37 = vector.broadcast %cst_19 : f32 to vector<2x32xf32>
    %38 = arith.mulf %37, %36 : vector<2x32xf32>
    %cst_20 = arith.constant 1.000000e+00 : f32
    %39 = vector.broadcast %cst_20 : f32 to vector<2x32xf32>
    %40 = arith.subf %38, %39 : vector<2x32xf32>
    %41 = vector.extract_strided_slice %33 {offsets = [0, 96], sizes = [2, 32], strides = [1, 1]} : vector<2x128xf32> to vector<2x32xf32>
    %42 = arith.mulf %35, %17 : vector<2x32xf32>
    %43 = arith.mulf %34, %40 : vector<2x32xf32>
    %44 = arith.addf %42, %43 : vector<2x32xf32>
    %45 = math.tanh %44 : vector<2x32xf32>
    %46 = arith.mulf %41, %45 : vector<2x32xf32>
    %47 = arith.truncf %46 : vector<2x32xf32> to vector<2x32xbf16>
    %48 = tpu.concatenate %46, %17 in 1 : vector<2x32xf32>, vector<2x32xf32> -> vector<2x64xf32>
    %49 = arith.truncf %48 : vector<2x64xf32> to vector<2x64xbf16>
    %cst_21 = arith.constant dense<0.000000e+00> : vector<2x128xf32>
    %50 = tpu.matmul %49, %2, %cst_21 {dimension_numbers = #tpu.dot_dimension_numbers<[1], [0], [0], [1], [0, 0, 1, 1], [], []>} : vector<2x64xbf16>, vector<64x128xbf16>, vector<2x128xf32> -> vector<2x128xf32>
    %51 = arith.addf %50, %10 : vector<2x128xf32>
    %52 = arith.negf %51 : vector<2x128xf32>
    %53 = math.exp %52 : vector<2x128xf32>
    %cst_22 = arith.constant 1.000000e+00 : f32
    %54 = vector.broadcast %cst_22 : f32 to vector<2x128xf32>
    %55 = arith.addf %54, %53 : vector<2x128xf32>
    %56 = arith.divf %54, %55 : vector<2x128xf32>
    %57 = vector.extract_strided_slice %56 {offsets = [0, 0], sizes = [2, 32], strides = [1, 1]} : vector<2x128xf32> to vector<2x32xf32>
    %58 = vector.extract_strided_slice %56 {offsets = [0, 32], sizes = [2, 32], strides = [1, 1]} : vector<2x128xf32> to vector<2x32xf32>
    %59 = vector.extract_strided_slice %56 {offsets = [0, 64], sizes = [2, 32], strides = [1, 1]} : vector<2x128xf32> to vector<2x32xf32>
    %cst_23 = arith.constant 2.000000e+00 : f32
    %60 = vector.broadcast %cst_23 : f32 to vector<2x32xf32>
    %61 = arith.mulf %60, %59 : vector<2x32xf32>
    %cst_24 = arith.constant 1.000000e+00 : f32
    %62 = vector.broadcast %cst_24 : f32 to vector<2x32xf32>
    %63 = arith.subf %61, %62 : vector<2x32xf32>
    %64 = vector.extract_strided_slice %56 {offsets = [0, 96], sizes = [2, 32], strides = [1, 1]} : vector<2x128xf32> to vector<2x32xf32>
    %65 = arith.mulf %58, %17 : vector<2x32xf32>
    %66 = arith.mulf %57, %63 : vector<2x32xf32>
    %67 = arith.addf %65, %66 : vector<2x32xf32>
    %68 = math.tanh %67 : vector<2x32xf32>
    %69 = arith.mulf %64, %68 : vector<2x32xf32>
    %70 = vector.extract_strided_slice %0 {offsets = [0, 2], sizes = [2, 1], strides = [1, 1]} : vector<2x16xf32> to vector<2x1xf32>
    %71 = vector.broadcast %70 : vector<2x1xf32> to vector<2x128xf32>
    %72 = arith.mulf %71, %13 : vector<2x128xf32>
    %73 = arith.addf %7, %72 : vector<2x128xf32>
    %74 = vector.extract_strided_slice %0 {offsets = [0, 3], sizes = [2, 1], strides = [1, 1]} : vector<2x16xf32> to vector<2x1xf32>
    %75 = vector.broadcast %74 : vector<2x1xf32> to vector<2x128xf32>
    %76 = arith.mulf %75, %16 : vector<2x128xf32>
    %77 = arith.addf %73, %76 : vector<2x128xf32>
    %cst_25 = arith.constant dense<0.000000e+00> : vector<2x128xf32>
    %78 = tpu.matmul %47, %1, %cst_25 {dimension_numbers = #tpu.dot_dimension_numbers<[1], [0], [0], [1], [0, 0, 1, 1], [], []>} : vector<2x32xbf16>, vector<32x128xbf16>, vector<2x128xf32> -> vector<2x128xf32>
    %79 = arith.addf %77, %78 : vector<2x128xf32>
    %80 = arith.negf %79 : vector<2x128xf32>
    %81 = math.exp %80 : vector<2x128xf32>
    %cst_26 = arith.constant 1.000000e+00 : f32
    %82 = vector.broadcast %cst_26 : f32 to vector<2x128xf32>
    %83 = arith.addf %82, %81 : vector<2x128xf32>
    %84 = arith.divf %82, %83 : vector<2x128xf32>
    %85 = vector.extract_strided_slice %84 {offsets = [0, 0], sizes = [2, 32], strides = [1, 1]} : vector<2x128xf32> to vector<2x32xf32>
    %86 = vector.extract_strided_slice %84 {offsets = [0, 32], sizes = [2, 32], strides = [1, 1]} : vector<2x128xf32> to vector<2x32xf32>
    %87 = vector.extract_strided_slice %84 {offsets = [0, 64], sizes = [2, 32], strides = [1, 1]} : vector<2x128xf32> to vector<2x32xf32>
    %cst_27 = arith.constant 2.000000e+00 : f32
    %88 = vector.broadcast %cst_27 : f32 to vector<2x32xf32>
    %89 = arith.mulf %88, %87 : vector<2x32xf32>
    %cst_28 = arith.constant 1.000000e+00 : f32
    %90 = vector.broadcast %cst_28 : f32 to vector<2x32xf32>
    %91 = arith.subf %89, %90 : vector<2x32xf32>
    %92 = vector.extract_strided_slice %84 {offsets = [0, 96], sizes = [2, 32], strides = [1, 1]} : vector<2x128xf32> to vector<2x32xf32>
    %93 = arith.mulf %86, %44 : vector<2x32xf32>
    %94 = arith.mulf %85, %91 : vector<2x32xf32>
    %95 = arith.addf %93, %94 : vector<2x32xf32>
    %96 = math.tanh %95 : vector<2x32xf32>
    %97 = arith.mulf %92, %96 : vector<2x32xf32>
    %98 = arith.truncf %97 : vector<2x32xf32> to vector<2x32xbf16>
    %99 = tpu.concatenate %97, %69 in 1 : vector<2x32xf32>, vector<2x32xf32> -> vector<2x64xf32>
    %100 = arith.truncf %99 : vector<2x64xf32> to vector<2x64xbf16>
    %cst_29 = arith.constant dense<0.000000e+00> : vector<2x128xf32>
    %101 = tpu.matmul %100, %2, %cst_29 {dimension_numbers = #tpu.dot_dimension_numbers<[1], [0], [0], [1], [0, 0, 1, 1], [], []>} : vector<2x64xbf16>, vector<64x128xbf16>, vector<2x128xf32> -> vector<2x128xf32>
    %102 = arith.addf %101, %10 : vector<2x128xf32>
    %103 = arith.negf %102 : vector<2x128xf32>
    %104 = math.exp %103 : vector<2x128xf32>
    %cst_30 = arith.constant 1.000000e+00 : f32
    %105 = vector.broadcast %cst_30 : f32 to vector<2x128xf32>
    %106 = arith.addf %105, %104 : vector<2x128xf32>
    %107 = arith.divf %105, %106 : vector<2x128xf32>
    %108 = vector.extract_strided_slice %107 {offsets = [0, 0], sizes = [2, 32], strides = [1, 1]} : vector<2x128xf32> to vector<2x32xf32>
    %109 = vector.extract_strided_slice %107 {offsets = [0, 32], sizes = [2, 32], strides = [1, 1]} : vector<2x128xf32> to vector<2x32xf32>
    %110 = vector.extract_strided_slice %107 {offsets = [0, 64], sizes = [2, 32], strides = [1, 1]} : vector<2x128xf32> to vector<2x32xf32>
    %cst_31 = arith.constant 2.000000e+00 : f32
    %111 = vector.broadcast %cst_31 : f32 to vector<2x32xf32>
    %112 = arith.mulf %111, %110 : vector<2x32xf32>
    %cst_32 = arith.constant 1.000000e+00 : f32
    %113 = vector.broadcast %cst_32 : f32 to vector<2x32xf32>
    %114 = arith.subf %112, %113 : vector<2x32xf32>
    %115 = vector.extract_strided_slice %107 {offsets = [0, 96], sizes = [2, 32], strides = [1, 1]} : vector<2x128xf32> to vector<2x32xf32>
    %116 = arith.mulf %109, %67 : vector<2x32xf32>
    %117 = arith.mulf %108, %114 : vector<2x32xf32>
    %118 = arith.addf %116, %117 : vector<2x32xf32>
    %119 = math.tanh %118 : vector<2x32xf32>
    %120 = arith.mulf %115, %119 : vector<2x32xf32>
    %121 = vector.extract_strided_slice %0 {offsets = [0, 4], sizes = [2, 1], strides = [1, 1]} : vector<2x16xf32> to vector<2x1xf32>
    %122 = vector.broadcast %121 : vector<2x1xf32> to vector<2x128xf32>
    %123 = arith.mulf %122, %13 : vector<2x128xf32>
    %124 = arith.addf %7, %123 : vector<2x128xf32>
    %125 = vector.extract_strided_slice %0 {offsets = [0, 5], sizes = [2, 1], strides = [1, 1]} : vector<2x16xf32> to vector<2x1xf32>
    %126 = vector.broadcast %125 : vector<2x1xf32> to vector<2x128xf32>
    %127 = arith.mulf %126, %16 : vector<2x128xf32>
    %128 = arith.addf %124, %127 : vector<2x128xf32>
    %cst_33 = arith.constant dense<0.000000e+00> : vector<2x128xf32>
    %129 = tpu.matmul %98, %1, %cst_33 {dimension_numbers = #tpu.dot_dimension_numbers<[1], [0], [0], [1], [0, 0, 1, 1], [], []>} : vector<2x32xbf16>, vector<32x128xbf16>, vector<2x128xf32> -> vector<2x128xf32>
    %130 = arith.addf %128, %129 : vector<2x128xf32>
    %131 = arith.negf %130 : vector<2x128xf32>
    %132 = math.exp %131 : vector<2x128xf32>
    %cst_34 = arith.constant 1.000000e+00 : f32
    %133 = vector.broadcast %cst_34 : f32 to vector<2x128xf32>
    %134 = arith.addf %133, %132 : vector<2x128xf32>
    %135 = arith.divf %133, %134 : vector<2x128xf32>
    %136 = vector.extract_strided_slice %135 {offsets = [0, 0], sizes = [2, 32], strides = [1, 1]} : vector<2x128xf32> to vector<2x32xf32>
    %137 = vector.extract_strided_slice %135 {offsets = [0, 32], sizes = [2, 32], strides = [1, 1]} : vector<2x128xf32> to vector<2x32xf32>
    %138 = vector.extract_strided_slice %135 {offsets = [0, 64], sizes = [2, 32], strides = [1, 1]} : vector<2x128xf32> to vector<2x32xf32>
    %cst_35 = arith.constant 2.000000e+00 : f32
    %139 = vector.broadcast %cst_35 : f32 to vector<2x32xf32>
    %140 = arith.mulf %139, %138 : vector<2x32xf32>
    %cst_36 = arith.constant 1.000000e+00 : f32
    %141 = vector.broadcast %cst_36 : f32 to vector<2x32xf32>
    %142 = arith.subf %140, %141 : vector<2x32xf32>
    %143 = vector.extract_strided_slice %135 {offsets = [0, 96], sizes = [2, 32], strides = [1, 1]} : vector<2x128xf32> to vector<2x32xf32>
    %144 = arith.mulf %137, %95 : vector<2x32xf32>
    %145 = arith.mulf %136, %142 : vector<2x32xf32>
    %146 = arith.addf %144, %145 : vector<2x32xf32>
    %147 = math.tanh %146 : vector<2x32xf32>
    %148 = arith.mulf %143, %147 : vector<2x32xf32>
    %149 = arith.truncf %148 : vector<2x32xf32> to vector<2x32xbf16>
    %150 = tpu.concatenate %148, %120 in 1 : vector<2x32xf32>, vector<2x32xf32> -> vector<2x64xf32>
    %151 = arith.truncf %150 : vector<2x64xf32> to vector<2x64xbf16>
    %cst_37 = arith.constant dense<0.000000e+00> : vector<2x128xf32>
    %152 = tpu.matmul %151, %2, %cst_37 {dimension_numbers = #tpu.dot_dimension_numbers<[1], [0], [0], [1], [0, 0, 1, 1], [], []>} : vector<2x64xbf16>, vector<64x128xbf16>, vector<2x128xf32> -> vector<2x128xf32>
    %153 = arith.addf %152, %10 : vector<2x128xf32>
    %154 = arith.negf %153 : vector<2x128xf32>
    %155 = math.exp %154 : vector<2x128xf32>
    %cst_38 = arith.constant 1.000000e+00 : f32
    %156 = vector.broadcast %cst_38 : f32 to vector<2x128xf32>
    %157 = arith.addf %156, %155 : vector<2x128xf32>
    %158 = arith.divf %156, %157 : vector<2x128xf32>
    %159 = vector.extract_strided_slice %158 {offsets = [0, 0], sizes = [2, 32], strides = [1, 1]} : vector<2x128xf32> to vector<2x32xf32>
    %160 = vector.extract_strided_slice %158 {offsets = [0, 32], sizes = [2, 32], strides = [1, 1]} : vector<2x128xf32> to vector<2x32xf32>
    %161 = vector.extract_strided_slice %158 {offsets = [0, 64], sizes = [2, 32], strides = [1, 1]} : vector<2x128xf32> to vector<2x32xf32>
    %cst_39 = arith.constant 2.000000e+00 : f32
    %162 = vector.broadcast %cst_39 : f32 to vector<2x32xf32>
    %163 = arith.mulf %162, %161 : vector<2x32xf32>
    %cst_40 = arith.constant 1.000000e+00 : f32
    %164 = vector.broadcast %cst_40 : f32 to vector<2x32xf32>
    %165 = arith.subf %163, %164 : vector<2x32xf32>
    %166 = vector.extract_strided_slice %158 {offsets = [0, 96], sizes = [2, 32], strides = [1, 1]} : vector<2x128xf32> to vector<2x32xf32>
    %167 = arith.mulf %160, %118 : vector<2x32xf32>
    %168 = arith.mulf %159, %165 : vector<2x32xf32>
    %169 = arith.addf %167, %168 : vector<2x32xf32>
    %170 = math.tanh %169 : vector<2x32xf32>
    %171 = arith.mulf %166, %170 : vector<2x32xf32>
    %172 = vector.extract_strided_slice %0 {offsets = [0, 6], sizes = [2, 1], strides = [1, 1]} : vector<2x16xf32> to vector<2x1xf32>
    %173 = vector.broadcast %172 : vector<2x1xf32> to vector<2x128xf32>
    %174 = arith.mulf %173, %13 : vector<2x128xf32>
    %175 = arith.addf %7, %174 : vector<2x128xf32>
    %176 = vector.extract_strided_slice %0 {offsets = [0, 7], sizes = [2, 1], strides = [1, 1]} : vector<2x16xf32> to vector<2x1xf32>
    %177 = vector.broadcast %176 : vector<2x1xf32> to vector<2x128xf32>
    %178 = arith.mulf %177, %16 : vector<2x128xf32>
    %179 = arith.addf %175, %178 : vector<2x128xf32>
    %cst_41 = arith.constant dense<0.000000e+00> : vector<2x128xf32>
    %180 = tpu.matmul %149, %1, %cst_41 {dimension_numbers = #tpu.dot_dimension_numbers<[1], [0], [0], [1], [0, 0, 1, 1], [], []>} : vector<2x32xbf16>, vector<32x128xbf16>, vector<2x128xf32> -> vector<2x128xf32>
    %181 = arith.addf %179, %180 : vector<2x128xf32>
    %182 = arith.negf %181 : vector<2x128xf32>
    %183 = math.exp %182 : vector<2x128xf32>
    %cst_42 = arith.constant 1.000000e+00 : f32
    %184 = vector.broadcast %cst_42 : f32 to vector<2x128xf32>
    %185 = arith.addf %184, %183 : vector<2x128xf32>
    %186 = arith.divf %184, %185 : vector<2x128xf32>
    %187 = vector.extract_strided_slice %186 {offsets = [0, 0], sizes = [2, 32], strides = [1, 1]} : vector<2x128xf32> to vector<2x32xf32>
    %188 = vector.extract_strided_slice %186 {offsets = [0, 32], sizes = [2, 32], strides = [1, 1]} : vector<2x128xf32> to vector<2x32xf32>
    %189 = vector.extract_strided_slice %186 {offsets = [0, 64], sizes = [2, 32], strides = [1, 1]} : vector<2x128xf32> to vector<2x32xf32>
    %cst_43 = arith.constant 2.000000e+00 : f32
    %190 = vector.broadcast %cst_43 : f32 to vector<2x32xf32>
    %191 = arith.mulf %190, %189 : vector<2x32xf32>
    %cst_44 = arith.constant 1.000000e+00 : f32
    %192 = vector.broadcast %cst_44 : f32 to vector<2x32xf32>
    %193 = arith.subf %191, %192 : vector<2x32xf32>
    %194 = vector.extract_strided_slice %186 {offsets = [0, 96], sizes = [2, 32], strides = [1, 1]} : vector<2x128xf32> to vector<2x32xf32>
    %195 = arith.mulf %188, %146 : vector<2x32xf32>
    %196 = arith.mulf %187, %193 : vector<2x32xf32>
    %197 = arith.addf %195, %196 : vector<2x32xf32>
    %198 = math.tanh %197 : vector<2x32xf32>
    %199 = arith.mulf %194, %198 : vector<2x32xf32>
    %200 = arith.truncf %199 : vector<2x32xf32> to vector<2x32xbf16>
    %201 = tpu.concatenate %199, %171 in 1 : vector<2x32xf32>, vector<2x32xf32> -> vector<2x64xf32>
    %202 = arith.truncf %201 : vector<2x64xf32> to vector<2x64xbf16>
    %cst_45 = arith.constant dense<0.000000e+00> : vector<2x128xf32>
    %203 = tpu.matmul %202, %2, %cst_45 {dimension_numbers = #tpu.dot_dimension_numbers<[1], [0], [0], [1], [0, 0, 1, 1], [], []>} : vector<2x64xbf16>, vector<64x128xbf16>, vector<2x128xf32> -> vector<2x128xf32>
    %204 = arith.addf %203, %10 : vector<2x128xf32>
    %205 = arith.negf %204 : vector<2x128xf32>
    %206 = math.exp %205 : vector<2x128xf32>
    %cst_46 = arith.constant 1.000000e+00 : f32
    %207 = vector.broadcast %cst_46 : f32 to vector<2x128xf32>
    %208 = arith.addf %207, %206 : vector<2x128xf32>
    %209 = arith.divf %207, %208 : vector<2x128xf32>
    %210 = vector.extract_strided_slice %209 {offsets = [0, 0], sizes = [2, 32], strides = [1, 1]} : vector<2x128xf32> to vector<2x32xf32>
    %211 = vector.extract_strided_slice %209 {offsets = [0, 32], sizes = [2, 32], strides = [1, 1]} : vector<2x128xf32> to vector<2x32xf32>
    %212 = vector.extract_strided_slice %209 {offsets = [0, 64], sizes = [2, 32], strides = [1, 1]} : vector<2x128xf32> to vector<2x32xf32>
    %cst_47 = arith.constant 2.000000e+00 : f32
    %213 = vector.broadcast %cst_47 : f32 to vector<2x32xf32>
    %214 = arith.mulf %213, %212 : vector<2x32xf32>
    %cst_48 = arith.constant 1.000000e+00 : f32
    %215 = vector.broadcast %cst_48 : f32 to vector<2x32xf32>
    %216 = arith.subf %214, %215 : vector<2x32xf32>
    %217 = vector.extract_strided_slice %209 {offsets = [0, 96], sizes = [2, 32], strides = [1, 1]} : vector<2x128xf32> to vector<2x32xf32>
    %218 = arith.mulf %211, %169 : vector<2x32xf32>
    %219 = arith.mulf %210, %216 : vector<2x32xf32>
    %220 = arith.addf %218, %219 : vector<2x32xf32>
    %221 = math.tanh %220 : vector<2x32xf32>
    %222 = arith.mulf %217, %221 : vector<2x32xf32>
    %223 = vector.extract_strided_slice %0 {offsets = [0, 8], sizes = [2, 1], strides = [1, 1]} : vector<2x16xf32> to vector<2x1xf32>
    %224 = vector.broadcast %223 : vector<2x1xf32> to vector<2x128xf32>
    %225 = arith.mulf %224, %13 : vector<2x128xf32>
    %226 = arith.addf %7, %225 : vector<2x128xf32>
    %227 = vector.extract_strided_slice %0 {offsets = [0, 9], sizes = [2, 1], strides = [1, 1]} : vector<2x16xf32> to vector<2x1xf32>
    %228 = vector.broadcast %227 : vector<2x1xf32> to vector<2x128xf32>
    %229 = arith.mulf %228, %16 : vector<2x128xf32>
    %230 = arith.addf %226, %229 : vector<2x128xf32>
    %cst_49 = arith.constant dense<0.000000e+00> : vector<2x128xf32>
    %231 = tpu.matmul %200, %1, %cst_49 {dimension_numbers = #tpu.dot_dimension_numbers<[1], [0], [0], [1], [0, 0, 1, 1], [], []>} : vector<2x32xbf16>, vector<32x128xbf16>, vector<2x128xf32> -> vector<2x128xf32>
    %232 = arith.addf %230, %231 : vector<2x128xf32>
    %233 = arith.negf %232 : vector<2x128xf32>
    %234 = math.exp %233 : vector<2x128xf32>
    %cst_50 = arith.constant 1.000000e+00 : f32
    %235 = vector.broadcast %cst_50 : f32 to vector<2x128xf32>
    %236 = arith.addf %235, %234 : vector<2x128xf32>
    %237 = arith.divf %235, %236 : vector<2x128xf32>
    %238 = vector.extract_strided_slice %237 {offsets = [0, 0], sizes = [2, 32], strides = [1, 1]} : vector<2x128xf32> to vector<2x32xf32>
    %239 = vector.extract_strided_slice %237 {offsets = [0, 32], sizes = [2, 32], strides = [1, 1]} : vector<2x128xf32> to vector<2x32xf32>
    %240 = vector.extract_strided_slice %237 {offsets = [0, 64], sizes = [2, 32], strides = [1, 1]} : vector<2x128xf32> to vector<2x32xf32>
    %cst_51 = arith.constant 2.000000e+00 : f32
    %241 = vector.broadcast %cst_51 : f32 to vector<2x32xf32>
    %242 = arith.mulf %241, %240 : vector<2x32xf32>
    %cst_52 = arith.constant 1.000000e+00 : f32
    %243 = vector.broadcast %cst_52 : f32 to vector<2x32xf32>
    %244 = arith.subf %242, %243 : vector<2x32xf32>
    %245 = vector.extract_strided_slice %237 {offsets = [0, 96], sizes = [2, 32], strides = [1, 1]} : vector<2x128xf32> to vector<2x32xf32>
    %246 = arith.mulf %239, %197 : vector<2x32xf32>
    %247 = arith.mulf %238, %244 : vector<2x32xf32>
    %248 = arith.addf %246, %247 : vector<2x32xf32>
    %249 = math.tanh %248 : vector<2x32xf32>
    %250 = arith.mulf %245, %249 : vector<2x32xf32>
    %251 = arith.truncf %250 : vector<2x32xf32> to vector<2x32xbf16>
    %252 = tpu.concatenate %250, %222 in 1 : vector<2x32xf32>, vector<2x32xf32> -> vector<2x64xf32>
    %253 = arith.truncf %252 : vector<2x64xf32> to vector<2x64xbf16>
    %cst_53 = arith.constant dense<0.000000e+00> : vector<2x128xf32>
    %254 = tpu.matmul %253, %2, %cst_53 {dimension_numbers = #tpu.dot_dimension_numbers<[1], [0], [0], [1], [0, 0, 1, 1], [], []>} : vector<2x64xbf16>, vector<64x128xbf16>, vector<2x128xf32> -> vector<2x128xf32>
    %255 = arith.addf %254, %10 : vector<2x128xf32>
    %256 = arith.negf %255 : vector<2x128xf32>
    %257 = math.exp %256 : vector<2x128xf32>
    %cst_54 = arith.constant 1.000000e+00 : f32
    %258 = vector.broadcast %cst_54 : f32 to vector<2x128xf32>
    %259 = arith.addf %258, %257 : vector<2x128xf32>
    %260 = arith.divf %258, %259 : vector<2x128xf32>
    %261 = vector.extract_strided_slice %260 {offsets = [0, 0], sizes = [2, 32], strides = [1, 1]} : vector<2x128xf32> to vector<2x32xf32>
    %262 = vector.extract_strided_slice %260 {offsets = [0, 32], sizes = [2, 32], strides = [1, 1]} : vector<2x128xf32> to vector<2x32xf32>
    %263 = vector.extract_strided_slice %260 {offsets = [0, 64], sizes = [2, 32], strides = [1, 1]} : vector<2x128xf32> to vector<2x32xf32>
    %cst_55 = arith.constant 2.000000e+00 : f32
    %264 = vector.broadcast %cst_55 : f32 to vector<2x32xf32>
    %265 = arith.mulf %264, %263 : vector<2x32xf32>
    %cst_56 = arith.constant 1.000000e+00 : f32
    %266 = vector.broadcast %cst_56 : f32 to vector<2x32xf32>
    %267 = arith.subf %265, %266 : vector<2x32xf32>
    %268 = vector.extract_strided_slice %260 {offsets = [0, 96], sizes = [2, 32], strides = [1, 1]} : vector<2x128xf32> to vector<2x32xf32>
    %269 = arith.mulf %262, %220 : vector<2x32xf32>
    %270 = arith.mulf %261, %267 : vector<2x32xf32>
    %271 = arith.addf %269, %270 : vector<2x32xf32>
    %272 = math.tanh %271 : vector<2x32xf32>
    %273 = arith.mulf %268, %272 : vector<2x32xf32>
    %274 = vector.extract_strided_slice %0 {offsets = [0, 10], sizes = [2, 1], strides = [1, 1]} : vector<2x16xf32> to vector<2x1xf32>
    %275 = vector.broadcast %274 : vector<2x1xf32> to vector<2x128xf32>
    %276 = arith.mulf %275, %13 : vector<2x128xf32>
    %277 = arith.addf %7, %276 : vector<2x128xf32>
    %278 = vector.extract_strided_slice %0 {offsets = [0, 11], sizes = [2, 1], strides = [1, 1]} : vector<2x16xf32> to vector<2x1xf32>
    %279 = vector.broadcast %278 : vector<2x1xf32> to vector<2x128xf32>
    %280 = arith.mulf %279, %16 : vector<2x128xf32>
    %281 = arith.addf %277, %280 : vector<2x128xf32>
    %cst_57 = arith.constant dense<0.000000e+00> : vector<2x128xf32>
    %282 = tpu.matmul %251, %1, %cst_57 {dimension_numbers = #tpu.dot_dimension_numbers<[1], [0], [0], [1], [0, 0, 1, 1], [], []>} : vector<2x32xbf16>, vector<32x128xbf16>, vector<2x128xf32> -> vector<2x128xf32>
    %283 = arith.addf %281, %282 : vector<2x128xf32>
    %284 = arith.negf %283 : vector<2x128xf32>
    %285 = math.exp %284 : vector<2x128xf32>
    %cst_58 = arith.constant 1.000000e+00 : f32
    %286 = vector.broadcast %cst_58 : f32 to vector<2x128xf32>
    %287 = arith.addf %286, %285 : vector<2x128xf32>
    %288 = arith.divf %286, %287 : vector<2x128xf32>
    %289 = vector.extract_strided_slice %288 {offsets = [0, 0], sizes = [2, 32], strides = [1, 1]} : vector<2x128xf32> to vector<2x32xf32>
    %290 = vector.extract_strided_slice %288 {offsets = [0, 32], sizes = [2, 32], strides = [1, 1]} : vector<2x128xf32> to vector<2x32xf32>
    %291 = vector.extract_strided_slice %288 {offsets = [0, 64], sizes = [2, 32], strides = [1, 1]} : vector<2x128xf32> to vector<2x32xf32>
    %cst_59 = arith.constant 2.000000e+00 : f32
    %292 = vector.broadcast %cst_59 : f32 to vector<2x32xf32>
    %293 = arith.mulf %292, %291 : vector<2x32xf32>
    %cst_60 = arith.constant 1.000000e+00 : f32
    %294 = vector.broadcast %cst_60 : f32 to vector<2x32xf32>
    %295 = arith.subf %293, %294 : vector<2x32xf32>
    %296 = vector.extract_strided_slice %288 {offsets = [0, 96], sizes = [2, 32], strides = [1, 1]} : vector<2x128xf32> to vector<2x32xf32>
    %297 = arith.mulf %290, %248 : vector<2x32xf32>
    %298 = arith.mulf %289, %295 : vector<2x32xf32>
    %299 = arith.addf %297, %298 : vector<2x32xf32>
    %300 = math.tanh %299 : vector<2x32xf32>
    %301 = arith.mulf %296, %300 : vector<2x32xf32>
    %302 = arith.truncf %301 : vector<2x32xf32> to vector<2x32xbf16>
    %303 = tpu.concatenate %301, %273 in 1 : vector<2x32xf32>, vector<2x32xf32> -> vector<2x64xf32>
    %304 = arith.truncf %303 : vector<2x64xf32> to vector<2x64xbf16>
    %cst_61 = arith.constant dense<0.000000e+00> : vector<2x128xf32>
    %305 = tpu.matmul %304, %2, %cst_61 {dimension_numbers = #tpu.dot_dimension_numbers<[1], [0], [0], [1], [0, 0, 1, 1], [], []>} : vector<2x64xbf16>, vector<64x128xbf16>, vector<2x128xf32> -> vector<2x128xf32>
    %306 = arith.addf %305, %10 : vector<2x128xf32>
    %307 = arith.negf %306 : vector<2x128xf32>
    %308 = math.exp %307 : vector<2x128xf32>
    %cst_62 = arith.constant 1.000000e+00 : f32
    %309 = vector.broadcast %cst_62 : f32 to vector<2x128xf32>
    %310 = arith.addf %309, %308 : vector<2x128xf32>
    %311 = arith.divf %309, %310 : vector<2x128xf32>
    %312 = vector.extract_strided_slice %311 {offsets = [0, 0], sizes = [2, 32], strides = [1, 1]} : vector<2x128xf32> to vector<2x32xf32>
    %313 = vector.extract_strided_slice %311 {offsets = [0, 32], sizes = [2, 32], strides = [1, 1]} : vector<2x128xf32> to vector<2x32xf32>
    %314 = vector.extract_strided_slice %311 {offsets = [0, 64], sizes = [2, 32], strides = [1, 1]} : vector<2x128xf32> to vector<2x32xf32>
    %cst_63 = arith.constant 2.000000e+00 : f32
    %315 = vector.broadcast %cst_63 : f32 to vector<2x32xf32>
    %316 = arith.mulf %315, %314 : vector<2x32xf32>
    %cst_64 = arith.constant 1.000000e+00 : f32
    %317 = vector.broadcast %cst_64 : f32 to vector<2x32xf32>
    %318 = arith.subf %316, %317 : vector<2x32xf32>
    %319 = vector.extract_strided_slice %311 {offsets = [0, 96], sizes = [2, 32], strides = [1, 1]} : vector<2x128xf32> to vector<2x32xf32>
    %320 = arith.mulf %313, %271 : vector<2x32xf32>
    %321 = arith.mulf %312, %318 : vector<2x32xf32>
    %322 = arith.addf %320, %321 : vector<2x32xf32>
    %323 = math.tanh %322 : vector<2x32xf32>
    %324 = arith.mulf %319, %323 : vector<2x32xf32>
    %325 = vector.extract_strided_slice %0 {offsets = [0, 12], sizes = [2, 1], strides = [1, 1]} : vector<2x16xf32> to vector<2x1xf32>
    %326 = vector.broadcast %325 : vector<2x1xf32> to vector<2x128xf32>
    %327 = arith.mulf %326, %13 : vector<2x128xf32>
    %328 = arith.addf %7, %327 : vector<2x128xf32>
    %329 = vector.extract_strided_slice %0 {offsets = [0, 13], sizes = [2, 1], strides = [1, 1]} : vector<2x16xf32> to vector<2x1xf32>
    %330 = vector.broadcast %329 : vector<2x1xf32> to vector<2x128xf32>
    %331 = arith.mulf %330, %16 : vector<2x128xf32>
    %332 = arith.addf %328, %331 : vector<2x128xf32>
    %cst_65 = arith.constant dense<0.000000e+00> : vector<2x128xf32>
    %333 = tpu.matmul %302, %1, %cst_65 {dimension_numbers = #tpu.dot_dimension_numbers<[1], [0], [0], [1], [0, 0, 1, 1], [], []>} : vector<2x32xbf16>, vector<32x128xbf16>, vector<2x128xf32> -> vector<2x128xf32>
    %334 = arith.addf %332, %333 : vector<2x128xf32>
    %335 = arith.negf %334 : vector<2x128xf32>
    %336 = math.exp %335 : vector<2x128xf32>
    %cst_66 = arith.constant 1.000000e+00 : f32
    %337 = vector.broadcast %cst_66 : f32 to vector<2x128xf32>
    %338 = arith.addf %337, %336 : vector<2x128xf32>
    %339 = arith.divf %337, %338 : vector<2x128xf32>
    %340 = vector.extract_strided_slice %339 {offsets = [0, 0], sizes = [2, 32], strides = [1, 1]} : vector<2x128xf32> to vector<2x32xf32>
    %341 = vector.extract_strided_slice %339 {offsets = [0, 32], sizes = [2, 32], strides = [1, 1]} : vector<2x128xf32> to vector<2x32xf32>
    %342 = vector.extract_strided_slice %339 {offsets = [0, 64], sizes = [2, 32], strides = [1, 1]} : vector<2x128xf32> to vector<2x32xf32>
    %cst_67 = arith.constant 2.000000e+00 : f32
    %343 = vector.broadcast %cst_67 : f32 to vector<2x32xf32>
    %344 = arith.mulf %343, %342 : vector<2x32xf32>
    %cst_68 = arith.constant 1.000000e+00 : f32
    %345 = vector.broadcast %cst_68 : f32 to vector<2x32xf32>
    %346 = arith.subf %344, %345 : vector<2x32xf32>
    %347 = vector.extract_strided_slice %339 {offsets = [0, 96], sizes = [2, 32], strides = [1, 1]} : vector<2x128xf32> to vector<2x32xf32>
    %348 = arith.mulf %341, %299 : vector<2x32xf32>
    %349 = arith.mulf %340, %346 : vector<2x32xf32>
    %350 = arith.addf %348, %349 : vector<2x32xf32>
    %351 = math.tanh %350 : vector<2x32xf32>
    %352 = arith.mulf %347, %351 : vector<2x32xf32>
    %353 = arith.truncf %352 : vector<2x32xf32> to vector<2x32xbf16>
    %354 = tpu.concatenate %352, %324 in 1 : vector<2x32xf32>, vector<2x32xf32> -> vector<2x64xf32>
    %355 = arith.truncf %354 : vector<2x64xf32> to vector<2x64xbf16>
    %cst_69 = arith.constant dense<0.000000e+00> : vector<2x128xf32>
    %356 = tpu.matmul %355, %2, %cst_69 {dimension_numbers = #tpu.dot_dimension_numbers<[1], [0], [0], [1], [0, 0, 1, 1], [], []>} : vector<2x64xbf16>, vector<64x128xbf16>, vector<2x128xf32> -> vector<2x128xf32>
    %357 = arith.addf %356, %10 : vector<2x128xf32>
    %358 = arith.negf %357 : vector<2x128xf32>
    %359 = math.exp %358 : vector<2x128xf32>
    %cst_70 = arith.constant 1.000000e+00 : f32
    %360 = vector.broadcast %cst_70 : f32 to vector<2x128xf32>
    %361 = arith.addf %360, %359 : vector<2x128xf32>
    %362 = arith.divf %360, %361 : vector<2x128xf32>
    %363 = vector.extract_strided_slice %362 {offsets = [0, 0], sizes = [2, 32], strides = [1, 1]} : vector<2x128xf32> to vector<2x32xf32>
    %364 = vector.extract_strided_slice %362 {offsets = [0, 32], sizes = [2, 32], strides = [1, 1]} : vector<2x128xf32> to vector<2x32xf32>
    %365 = vector.extract_strided_slice %362 {offsets = [0, 64], sizes = [2, 32], strides = [1, 1]} : vector<2x128xf32> to vector<2x32xf32>
    %cst_71 = arith.constant 2.000000e+00 : f32
    %366 = vector.broadcast %cst_71 : f32 to vector<2x32xf32>
    %367 = arith.mulf %366, %365 : vector<2x32xf32>
    %cst_72 = arith.constant 1.000000e+00 : f32
    %368 = vector.broadcast %cst_72 : f32 to vector<2x32xf32>
    %369 = arith.subf %367, %368 : vector<2x32xf32>
    %370 = vector.extract_strided_slice %362 {offsets = [0, 96], sizes = [2, 32], strides = [1, 1]} : vector<2x128xf32> to vector<2x32xf32>
    %371 = arith.mulf %364, %322 : vector<2x32xf32>
    %372 = arith.mulf %363, %369 : vector<2x32xf32>
    %373 = arith.addf %371, %372 : vector<2x32xf32>
    %374 = math.tanh %373 : vector<2x32xf32>
    %375 = arith.mulf %370, %374 : vector<2x32xf32>
    %376 = vector.extract_strided_slice %0 {offsets = [0, 14], sizes = [2, 1], strides = [1, 1]} : vector<2x16xf32> to vector<2x1xf32>
    %377 = vector.broadcast %376 : vector<2x1xf32> to vector<2x128xf32>
    %378 = arith.mulf %377, %13 : vector<2x128xf32>
    %379 = arith.addf %7, %378 : vector<2x128xf32>
    %380 = vector.extract_strided_slice %0 {offsets = [0, 15], sizes = [2, 1], strides = [1, 1]} : vector<2x16xf32> to vector<2x1xf32>
    %381 = vector.broadcast %380 : vector<2x1xf32> to vector<2x128xf32>
    %382 = arith.mulf %381, %16 : vector<2x128xf32>
    %383 = arith.addf %379, %382 : vector<2x128xf32>
    %cst_73 = arith.constant dense<0.000000e+00> : vector<2x128xf32>
    %384 = tpu.matmul %353, %1, %cst_73 {dimension_numbers = #tpu.dot_dimension_numbers<[1], [0], [0], [1], [0, 0, 1, 1], [], []>} : vector<2x32xbf16>, vector<32x128xbf16>, vector<2x128xf32> -> vector<2x128xf32>
    %385 = arith.addf %383, %384 : vector<2x128xf32>
    %386 = arith.negf %385 : vector<2x128xf32>
    %387 = math.exp %386 : vector<2x128xf32>
    %cst_74 = arith.constant 1.000000e+00 : f32
    %388 = vector.broadcast %cst_74 : f32 to vector<2x128xf32>
    %389 = arith.addf %388, %387 : vector<2x128xf32>
    %390 = arith.divf %388, %389 : vector<2x128xf32>
    %391 = vector.extract_strided_slice %390 {offsets = [0, 0], sizes = [2, 32], strides = [1, 1]} : vector<2x128xf32> to vector<2x32xf32>
    %392 = vector.extract_strided_slice %390 {offsets = [0, 32], sizes = [2, 32], strides = [1, 1]} : vector<2x128xf32> to vector<2x32xf32>
    %393 = vector.extract_strided_slice %390 {offsets = [0, 64], sizes = [2, 32], strides = [1, 1]} : vector<2x128xf32> to vector<2x32xf32>
    %cst_75 = arith.constant 2.000000e+00 : f32
    %394 = vector.broadcast %cst_75 : f32 to vector<2x32xf32>
    %395 = arith.mulf %394, %393 : vector<2x32xf32>
    %cst_76 = arith.constant 1.000000e+00 : f32
    %396 = vector.broadcast %cst_76 : f32 to vector<2x32xf32>
    %397 = arith.subf %395, %396 : vector<2x32xf32>
    %398 = vector.extract_strided_slice %390 {offsets = [0, 96], sizes = [2, 32], strides = [1, 1]} : vector<2x128xf32> to vector<2x32xf32>
    %399 = arith.mulf %392, %350 : vector<2x32xf32>
    %400 = arith.mulf %391, %397 : vector<2x32xf32>
    %401 = arith.addf %399, %400 : vector<2x32xf32>
    %402 = math.tanh %401 : vector<2x32xf32>
    %403 = arith.mulf %398, %402 : vector<2x32xf32>
    %404 = tpu.concatenate %403, %375 in 1 : vector<2x32xf32>, vector<2x32xf32> -> vector<2x64xf32>
    %405 = arith.truncf %404 : vector<2x64xf32> to vector<2x64xbf16>
    %cst_77 = arith.constant dense<0.000000e+00> : vector<2x128xf32>
    %406 = tpu.matmul %405, %2, %cst_77 {dimension_numbers = #tpu.dot_dimension_numbers<[1], [0], [0], [1], [0, 0, 1, 1], [], []>} : vector<2x64xbf16>, vector<64x128xbf16>, vector<2x128xf32> -> vector<2x128xf32>
    %407 = arith.addf %406, %10 : vector<2x128xf32>
    %408 = arith.negf %407 : vector<2x128xf32>
    %409 = math.exp %408 : vector<2x128xf32>
    %cst_78 = arith.constant 1.000000e+00 : f32
    %410 = vector.broadcast %cst_78 : f32 to vector<2x128xf32>
    %411 = arith.addf %410, %409 : vector<2x128xf32>
    %412 = arith.divf %410, %411 : vector<2x128xf32>
    %413 = vector.extract_strided_slice %412 {offsets = [0, 0], sizes = [2, 32], strides = [1, 1]} : vector<2x128xf32> to vector<2x32xf32>
    %414 = vector.extract_strided_slice %412 {offsets = [0, 32], sizes = [2, 32], strides = [1, 1]} : vector<2x128xf32> to vector<2x32xf32>
    %415 = vector.extract_strided_slice %412 {offsets = [0, 64], sizes = [2, 32], strides = [1, 1]} : vector<2x128xf32> to vector<2x32xf32>
    %cst_79 = arith.constant 2.000000e+00 : f32
    %416 = vector.broadcast %cst_79 : f32 to vector<2x32xf32>
    %417 = arith.mulf %416, %415 : vector<2x32xf32>
    %cst_80 = arith.constant 1.000000e+00 : f32
    %418 = vector.broadcast %cst_80 : f32 to vector<2x32xf32>
    %419 = arith.subf %417, %418 : vector<2x32xf32>
    %420 = vector.extract_strided_slice %412 {offsets = [0, 96], sizes = [2, 32], strides = [1, 1]} : vector<2x128xf32> to vector<2x32xf32>
    %421 = arith.mulf %414, %373 : vector<2x32xf32>
    %422 = arith.mulf %413, %419 : vector<2x32xf32>
    %423 = arith.addf %421, %422 : vector<2x32xf32>
    %424 = math.tanh %423 : vector<2x32xf32>
    %425 = arith.mulf %420, %424 : vector<2x32xf32>
    %426 = vector.broadcast %3 : vector<1x32xf32> to vector<2x32xf32>
    %427 = arith.mulf %425, %426 : vector<2x32xf32>
    %cst_81 = arith.constant dense<0.000000e+00> : vector<2xf32>
    %428 = vector.multi_reduction <add>, %427, %cst_81 [1] : vector<2x32xf32> to vector<2xf32>
    %429 = vector.shape_cast %428 : vector<2xf32> to vector<2x1xf32>
    %430 = vector.broadcast %4 : vector<1x1xf32> to vector<2x1xf32>
    %431 = arith.addf %429, %430 : vector<2x1xf32>
    %c0_82 = arith.constant 0 : index
    %c0_83 = arith.constant 0 : index
    %432 = vector.load %arg8[%c0_82, %c0_83] : memref<2x1xf32, #tpu.memory_space<vmem>>, vector<2x1xf32>
    tpu.vector_store %arg8[%c0_82, %c0_83], %431 {strides = array<i32>} : memref<2x1xf32, #tpu.memory_space<vmem>>, vector<2x1xf32>,
    return
  }
}

</mosaic_0001>

<llo_original>
// kernel: tpu_custom_call.1
$region0: #{tpu_custom_call.1}
  #allocation0 [shape = 'u32[]', space=smem, size = 0x4, offset = 0x4, fixed_abs, tag = 'smem constant byte address 0x4 - core index']
  #allocation1 [shape = 'u32[72,128]{1,0:T(1,128)}', space=vmem, size = 0x9000, scoped, tag = 'internal scratch']
  #allocation2 [shape = 'f32[1,1]{1,0:T(1,128)S(1)}', space=vmem, size = 0x200, scoped, tag = 'scoped memory for tpu_custom_call.1']
  %s0 = inlined_call_operand.vmem [shape: f32[2,16], index: 0, kind: input, shape index: {}]
  %s1 = inlined_call_operand.hbm [shape: f32[2,128], index: 1, kind: input, shape index: {}]
  %s2 = inlined_call_operand.hbm [shape: bf16[32,128], index: 2, kind: input, shape index: {}]
  %s3 = inlined_call_operand.vmem [shape: f32[1,128], index: 3, kind: input, shape index: {}]
  %s4 = inlined_call_operand.hbm [shape: bf16[64,128], index: 4, kind: input, shape index: {}]
  %s5 = inlined_call_operand.vmem [shape: f32[1,128], index: 5, kind: input, shape index: {}]
  %s6 = inlined_call_operand.vmem [shape: f32[1,32], index: 6, kind: input, shape index: {}]
  %s7 = inlined_call_operand.<no memory space> [shape: f32[1,1], index: 7, kind: input, shape index: {}]
  %s8 = inlined_call_operand.vmem [shape: f32[2,1], index: 8, kind: output, shape index: {}]
  %s9 = sld [smem:[#allocation0]]
  $region54: #{tpu_custom_call.1} parent=0
    _
  %s11 = ssub.s32 1, %s9
  %s12 = scalar_select 0, %s11, %s9
  %v13 = vstv %s7
  %14 = vst [vmem:[#allocation2] sm:$0x1] %v13
  $region1: #{tpu_custom_call.1} parent=0
    #allocation3 [shape = 'u8[1024]{0}', space=vmem, size = 0x400, scoped, tag = 'input window, operand 1, single buffered']
    #allocation4 [shape = 's32[1]{0}', space=sflag, size = 0x4, scoped, tag = 'scoped memory for tpu_custom_call.1']
    #allocation5 [shape = 'u8[8192]{0}', space=vmem, size = 0x2000, scoped, tag = 'input window, operand 2, single buffered']
    #allocation6 [shape = 's32[1]{0}', space=sflag, size = 0x4, scoped, tag = 'scoped memory for tpu_custom_call.1']
    #allocation7 [shape = 'u8[16384]{0}', space=vmem, size = 0x4000, scoped, tag = 'input window, operand 4, single buffered']
    %15 = vsyncpa [#allocation4], 0
    %16 = vsyncpa [#allocation6], 0
    // Predicated region
    $region2: #{tpu_custom_call.1} parent=1 // pred_check
      _
    $region3: #{tpu_custom_call.1} parent=1 // pred_check_branch
      %18 = sbr.rel (0) target = $region5
    $region4: #{tpu_custom_call.1} parent=1 // pred_region
      _
    $region5: #{tpu_custom_call.1} parent=1 // pred_fallthru
      _
    // Predicated region
    $region6: #{tpu_custom_call.1} parent=1 // pred_check
      _
    $region7: #{tpu_custom_call.1} parent=1 // pred_check_branch
      %20 = sbr.rel (0) target = $region9
    $region8: #{tpu_custom_call.1} parent=1 // pred_region
      %22 = vsyncadd [#allocation4], 0
      %s24 = sshll.u32 %s1, 4
      %s25 = int_to_ptr.hbm [resolvable:$true] %s24
      %s26 = sshll.u32 [#allocation3], 4
      %s27 = int_to_ptr.vmem [resolvable:$true] %s26
      %29 = dma.hbm_to_vmem [thread:$0]  %s25, 32, %s27, [#allocation4]
    $region9: #{tpu_custom_call.1} parent=1 // pred_fallthru
      _
    // Predicated region
    $region10: #{tpu_custom_call.1} parent=1 // pred_check
      _
    $region11: #{tpu_custom_call.1} parent=1 // pred_check_branch
      %31 = sbr.rel (0) target = $region13
    $region12: #{tpu_custom_call.1} parent=1 // pred_region
      %33 = vsyncadd [#allocation6], 0
      %s34 = sshll.u32 %s2, 4
      %s35 = int_to_ptr.hbm [resolvable:$true] %s34
      %s36 = sshll.u32 [#allocation5], 4
      %s37 = int_to_ptr.vmem [resolvable:$true] %s36
      %42 = dma.hbm_to_vmem [thread:$0]  %s35, 256, %s37, [#allocation6], 64, 64, 4
    $region13: #{tpu_custom_call.1} parent=1 // pred_fallthru
      _
    // Predicated region
    $region14: #{tpu_custom_call.1} parent=1 // pred_check
      _
    $region15: #{tpu_custom_call.1} parent=1 // pred_check_branch
      %44 = sbr.rel (0) target = $region17
    $region16: #{tpu_custom_call.1} parent=1 // pred_region
      _
    $region17: #{tpu_custom_call.1} parent=1 // pred_fallthru
      _
    // Predicated region
    $region18: #{tpu_custom_call.1} parent=1 // pred_check
      _
    $region19: #{tpu_custom_call.1} parent=1 // pred_check_branch
      %46 = sbr.rel (0) target = $region21
    $region20: #{tpu_custom_call.1} parent=1 // pred_region
      %48 = vsyncadd [#allocation6], 0
      %s49 = sshll.u32 %s4, 4
      %s50 = int_to_ptr.hbm [resolvable:$true] %s49
      %s51 = sshll.u32 [#allocation7], 4
      %s52 = int_to_ptr.vmem [resolvable:$true] %s51
      %57 = dma.hbm_to_vmem [thread:$0]  %s50, 512, %s52, [#allocation6], 64, 64, 4
    $region21: #{tpu_custom_call.1} parent=1 // pred_fallthru
      _
    // Predicated region
    $region22: #{tpu_custom_call.1} parent=1 // pred_check
      _
    $region23: #{tpu_custom_call.1} parent=1 // pred_check_branch
      %59 = sbr.rel (0) target = $region25
    $region24: #{tpu_custom_call.1} parent=1 // pred_region
      _
    $region25: #{tpu_custom_call.1} parent=1 // pred_fallthru
      _
    // Predicated region
    $region26: #{tpu_custom_call.1} parent=1 // pred_check
      _
    $region27: #{tpu_custom_call.1} parent=1 // pred_check_branch
      %61 = sbr.rel (0) target = $region29
    $region28: #{tpu_custom_call.1} parent=1 // pred_region
      _
    $region29: #{tpu_custom_call.1} parent=1 // pred_fallthru
      _
    // Predicated region
    $region30: #{tpu_custom_call.1} parent=1 // pred_check
      _
    $region31: #{tpu_custom_call.1} parent=1 // pred_check_branch
      %63 = sbr.rel (0) target = $region33
    $region32: #{tpu_custom_call.1} parent=1 // pred_region
      _
    $region33: #{tpu_custom_call.1} parent=1 // pred_fallthru
      _
    // Predicated region
    $region34: #{tpu_custom_call.1} parent=1 // pred_check
      _
    $region35: #{tpu_custom_call.1} parent=1 // pred_check_branch
      %65 = sbr.rel (0) target = $region37
    $region36: #{tpu_custom_call.1} parent=1 // pred_region
      %67 = dma.done [#allocation4], 32
    $region37: #{tpu_custom_call.1} parent=1 // pred_fallthru
      _
    // Predicated region
    $region38: #{tpu_custom_call.1} parent=1 // pred_check
      _
    $region39: #{tpu_custom_call.1} parent=1 // pred_check_branch
      %69 = sbr.rel (0) target = $region41
    $region40: #{tpu_custom_call.1} parent=1 // pred_region
      %71 = dma.done [#allocation6], 256
    $region41: #{tpu_custom_call.1} parent=1 // pred_fallthru
      _
    // Predicated region
    $region42: #{tpu_custom_call.1} parent=1 // pred_check
      _
    $region43: #{tpu_custom_call.1} parent=1 // pred_check_branch
      %73 = sbr.rel (0) target = $region45
    $region44: #{tpu_custom_call.1} parent=1 // pred_region
      %75 = dma.done [#allocation6], 512
    $region45: #{tpu_custom_call.1} parent=1 // pred_fallthru
      _
    %v77 = vld [vmem:[%s0] sm:$0x3]
    %v78 = vld [vmem:[#allocation5] sm:$0xf]
    %v79 = vld [vmem:[#allocation5 + $0x4] sm:$0xf]
    %v80 = vld [vmem:[#allocation5 + $0x8] sm:$0xf]
    %v81 = vld [vmem:[#allocation5 + $0xc] sm:$0xf]
    %v82 = vld [vmem:[#allocation7] sm:$0xf]
    %v83 = vld [vmem:[#allocation7 + $0x4] sm:$0xf]
    %v84 = vld [vmem:[#allocation7 + $0x8] sm:$0xf]
    %v85 = vld [vmem:[#allocation7 + $0xc] sm:$0xf]
    %v86 = vld [vmem:[#allocation7 + $0x10] sm:$0xf]
    %v87 = vld [vmem:[#allocation7 + $0x14] sm:$0xf]
    %v88 = vld [vmem:[#allocation7 + $0x18] sm:$0xf]
    %v89 = vld [vmem:[#allocation7 + $0x1c] sm:$0xf]
    %v90 = vld [vmem:[%s6] sm:$0x1]
    %v91 = vld [vmem:[#allocation2] sm:$0x1]
    %v92 = vld [vmem:[%s3] sm:$0x1]
    %v94 = vperm.slane %v92, 0
    %v96 = vld [vmem:[%s5] sm:$0x1]
    %v98 = vperm.slane %v96, 0
    %v100 = vld [vmem:[#allocation3] sm:$0x1]
    %v101 = vperm.slane %v100, 0
    %v102 = vld [vmem:[#allocation3 + $0x1] sm:$0x1]
    %v103 = vperm.slane %v102, 0
    %105 = vset.pattern.permute.xlu0 0
    %106 = vperm.xlu0 %105, %v77
    %v107 = vpop.permute.xlu0 %106
    %v109 = vmul.f32 %v107, %v101
    %v110 = vadd.f32 %v94, %v109
    %111 = vset.pattern.permute.xlu0 1
    %112 = vperm.xlu0 %111, %v77
    %v113 = vpop.permute.xlu0 %112
    %v115 = vmul.f32 %v113, %v103
    %v116 = vadd.f32 %v110, %v115
    %v121 = vunpack.c.l.b16 %v78
    %v122 = vunpack.c.l.b16 %v79
    %v123 = vunpack.c.l.b16 %v80
    %v124 = vunpack.c.l.b16 %v81
    %v125 = vpack.c.b16 %v122, %v121
    %v126 = vpack.c.b16 %v124, %v123
    %vm129 = vcmask 261120
    %v131 = vsel %vm129, 0, 0
    %133 = vmatpush.bf16.msra.mxu0 0
    %134 = vmatpush.bf16.msra.mxu0 0
    %135 = vmatpush.bf16.msra.mxu0 0
    %136 = vmatpush.bf16.msra.mxu0 0
    %137 = vmatpush.bf16.msra.mxu0 0
    %138 = vmatpush.bf16.msra.mxu0 0
    %139 = vmatpush.bf16.msra.mxu0 %v126
    %140 = vmatpush.bf16.msra.mxu0 %v125
    %141 = vmatmul.bf16.gmra.mxu0 %v131
    %v142 = vpop.f32.mrf.mxu0
    %v143 = vadd.f32 0.0, %v142
    %v144 = vpop.f32.mrf.mxu0
    %145 = vdwg.mxu0
    %v146 = vadd.f32 %v116, %v143
    %v147 = vxor.u32 %v146, 2147483648
    %v148 = vmul.f32 %v147, 1.442695
    %v149 = vpow.pop %v148
    %v150 = vadd.f32 %v149, 1.0
    %v151 = vrcp.pop %v150
    %v152 = vmul.f32 %v150, %v151
    %v153 = vsub.f32 1.0, %v152
    %v154 = vmul.f32 %v151, %v153
    %v155 = vadd.f32 %v151, %v154
    %vm156 = vweird.f32 %v150
    %vm157 = vweird.f32 %v151
    %vm158 = vmor %vm156, %vm157
    %v159 = vsel %vm158, %v151, %v155
    %v160 = vand.u32 2147483647, %v150
    %vm161 = vcmp.eq.f32.partialorder %v160, 8.507059e+37
    %v162 = vand.u32 %v150, 2147483648
    %v163 = vor.u32 1.1754944e-38, %v162
    %v164 = vsel %vm161, %v163, %v159
    %v165 = vmul.f32 1.0, %v164
    %v166 = vmul.f32 %v165, 2.0
    %v167 = vsub.f32 %v166, 1.0
    %v168 = vmul.f32 %v165, 0.0
    %170 = vrot.lane.b32.xlu0 %v167, 64
    %v171 = vpop.permute.xlu0 %170
    %v173 = vmul.f32 %v165, %v171
    %175 = vrot.lane.b32.xlu0 %v173, 32
    %v176 = vpop.permute.xlu0 %175
    %v178 = vadd.f32 %v168, %v176
    %v179 = vtanh.pop %v178
    %181 = vrot.lane.b32.xlu0 %v179, 64
    %v182 = vpop.permute.xlu0 %181
    %v184 = vmul.f32 %v165, %v182
    %v185 = vpack.c.bf16 %v184, %v184
    %187 = vrot.lane.b32.xlu0 %v184, 32
    %v188 = vpop.permute.xlu0 %187
    %v190 = vsel %vm129, %v188, 0.0
    %v191 = vpack.c.bf16 %v190, %v190
    %v200 = vunpack.c.l.b16 %v82
    %v201 = vunpack.c.l.b16 %v83
    %v202 = vunpack.c.l.b16 %v84
    %v203 = vunpack.c.l.b16 %v85
    %v204 = vunpack.c.l.b16 %v86
    %v205 = vunpack.c.l.b16 %v87
    %v206 = vunpack.c.l.b16 %v88
    %v207 = vunpack.c.l.b16 %v89
    %v208 = vpack.c.b16 %v201, %v200
    %v209 = vpack.c.b16 %v203, %v202
    %v210 = vpack.c.b16 %v205, %v204
    %v211 = vpack.c.b16 %v207, %v206
    %vm216 = vcmask 523264
    %v218 = vsel %vm216, %v191, 0
    %220 = vmatpush.bf16.msra.mxu0 0
    %221 = vmatpush.bf16.msra.mxu0 0
    %222 = vmatpush.bf16.msra.mxu0 0
    %223 = vmatpush.bf16.msra.mxu0 0
    %224 = vmatpush.bf16.msra.mxu0 %v211
    %225 = vmatpush.bf16.msra.mxu0 %v210
    %226 = vmatpush.bf16.msra.mxu0 %v209
    %227 = vmatpush.bf16.msra.mxu0 %v208
    %228 = vmatmul.bf16.gmra.mxu0 %v218
    %v229 = vpop.f32.mrf.mxu0
    %v230 = vadd.f32 %v98, %v229
    %v231 = vpop.f32.mrf.mxu0
    %232 = vdwg.mxu0
    %v233 = vxor.u32 %v230, 2147483648
    %v234 = vmul.f32 %v233, 1.442695
    %v235 = vpow.pop %v234
    %v236 = vadd.f32 %v235, 1.0
    %v237 = vrcp.pop %v236
    %v238 = vmul.f32 %v236, %v237
    %v239 = vsub.f32 1.0, %v238
    %v240 = vmul.f32 %v237, %v239
    %v241 = vadd.f32 %v237, %v240
    %vm242 = vweird.f32 %v236
    %vm243 = vweird.f32 %v237
    %vm244 = vmor %vm242, %vm243
    %v245 = vsel %vm244, %v237, %v241
    %v246 = vand.u32 2147483647, %v236
    %vm247 = vcmp.eq.f32.partialorder %v246, 8.507059e+37
    %v248 = vand.u32 %v236, 2147483648
    %v249 = vor.u32 1.1754944e-38, %v248
    %v250 = vsel %vm247, %v249, %v245
    %v251 = vmul.f32 1.0, %v250
    %v252 = vmul.f32 %v251, 2.0
    %v253 = vsub.f32 %v252, 1.0
    %v254 = vmul.f32 %v251, 0.0
    %256 = vrot.lane.b32.xlu0 %v253, 64
    %v257 = vpop.permute.xlu0 %256
    %v259 = vmul.f32 %v251, %v257
    %261 = vrot.lane.b32.xlu0 %v259, 32
    %v262 = vpop.permute.xlu0 %261
    %v264 = vadd.f32 %v254, %v262
    %v265 = vtanh.pop %v264
    %267 = vrot.lane.b32.xlu0 %v265, 64
    %v268 = vpop.permute.xlu0 %267
    %v270 = vmul.f32 %v251, %v268
    %271 = vset.pattern.permute.xlu0 2
    %272 = vperm.xlu0 %271, %v77
    %v273 = vpop.permute.xlu0 %272
    %v275 = vmul.f32 %v273, %v101
    %v276 = vadd.f32 %v94, %v275
    %277 = vset.pattern.permute.xlu0 3
    %278 = vperm.xlu0 %277, %v77
    %v279 = vpop.permute.xlu0 %278
    %v281 = vmul.f32 %v279, %v103
    %v282 = vadd.f32 %v276, %v281
    %284 = vrot.lane.b32.xlu0 %v185, 32
    %v285 = vpop.permute.xlu0 %284
    %v287 = vsel %vm129, %v285, 0
    %289 = vmatpush.bf16.msra.mxu0 0
    %290 = vmatpush.bf16.msra.mxu0 0
    %291 = vmatpush.bf16.msra.mxu0 0
    %292 = vmatpush.bf16.msra.mxu0 0
    %293 = vmatpush.bf16.msra.mxu0 0
    %294 = vmatpush.bf16.msra.mxu0 0
    %295 = vmatpush.bf16.msra.mxu0 %v126
    %296 = vmatpush.bf16.msra.mxu0 %v125
    %297 = vmatmul.bf16.gmra.mxu0 %v287
    %v298 = vpop.f32.mrf.mxu0
    %v299 = vadd.f32 0.0, %v298
    %v300 = vpop.f32.mrf.mxu0
    %301 = vdwg.mxu0
    %v302 = vadd.f32 %v282, %v299
    %v303 = vxor.u32 %v302, 2147483648
    %v304 = vmul.f32 %v303, 1.442695
    %v305 = vpow.pop %v304
    %v306 = vadd.f32 %v305, 1.0
    %v307 = vrcp.pop %v306
    %v308 = vmul.f32 %v306, %v307
    %v309 = vsub.f32 1.0, %v308
    %v310 = vmul.f32 %v307, %v309
    %v311 = vadd.f32 %v307, %v310
    %vm312 = vweird.f32 %v306
    %vm313 = vweird.f32 %v307
    %vm314 = vmor %vm312, %vm313
    %v315 = vsel %vm314, %v307, %v311
    %v316 = vand.u32 2147483647, %v306
    %vm317 = vcmp.eq.f32.partialorder %v316, 8.507059e+37
    %v318 = vand.u32 %v306, 2147483648
    %v319 = vor.u32 1.1754944e-38, %v318
    %v320 = vsel %vm317, %v319, %v315
    %v321 = vmul.f32 1.0, %v320
    %v322 = vmul.f32 %v321, 2.0
    %v323 = vsub.f32 %v322, 1.0
    %v324 = vmul.f32 %v321, %v178
    %326 = vrot.lane.b32.xlu0 %v323, 64
    %v327 = vpop.permute.xlu0 %326
    %v329 = vmul.f32 %v321, %v327
    %331 = vrot.lane.b32.xlu0 %v329, 32
    %v332 = vpop.permute.xlu0 %331
    %v334 = vadd.f32 %v324, %v332
    %v335 = vtanh.pop %v334
    %337 = vrot.lane.b32.xlu0 %v335, 64
    %v338 = vpop.permute.xlu0 %337
    %v340 = vmul.f32 %v321, %v338
    %v341 = vpack.c.bf16 %v340, %v340
    %343 = vrot.lane.b32.xlu0 %v340, 32
    %v344 = vpop.permute.xlu0 %343
    %347 = vrot.lane.b32.xlu0 %v270, 64
    %v348 = vpop.permute.xlu0 %347
    %v350 = vsel %vm129, %v344, %v348
    %v351 = vpack.c.bf16 %v350, %v350
    %v353 = vsel %vm216, %v351, 0
    %355 = vmatpush.bf16.msra.mxu0 0
    %356 = vmatpush.bf16.msra.mxu0 0
    %357 = vmatpush.bf16.msra.mxu0 0
    %358 = vmatpush.bf16.msra.mxu0 0
    %359 = vmatpush.bf16.msra.mxu0 %v211
    %360 = vmatpush.bf16.msra.mxu0 %v210
    %361 = vmatpush.bf16.msra.mxu0 %v209
    %362 = vmatpush.bf16.msra.mxu0 %v208
    %363 = vmatmul.bf16.gmra.mxu0 %v353
    %v364 = vpop.f32.mrf.mxu0
    %v365 = vadd.f32 %v98, %v364
    %v366 = vpop.f32.mrf.mxu0
    %367 = vdwg.mxu0
    %v368 = vxor.u32 %v365, 2147483648
    %v369 = vmul.f32 %v368, 1.442695
    %v370 = vpow.pop %v369
    %v371 = vadd.f32 %v370, 1.0
    %v372 = vrcp.pop %v371
    %v373 = vmul.f32 %v371, %v372
    %v374 = vsub.f32 1.0, %v373
    %v375 = vmul.f32 %v372, %v374
    %v376 = vadd.f32 %v372, %v375
    %vm377 = vweird.f32 %v371
    %vm378 = vweird.f32 %v372
    %vm379 = vmor %vm377, %vm378
    %v380 = vsel %vm379, %v372, %v376
    %v381 = vand.u32 2147483647, %v371
    %vm382 = vcmp.eq.f32.partialorder %v381, 8.507059e+37
    %v383 = vand.u32 %v371, 2147483648
    %v384 = vor.u32 1.1754944e-38, %v383
    %v385 = vsel %vm382, %v384, %v380
    %v386 = vmul.f32 1.0, %v385
    %v387 = vmul.f32 %v386, 2.0
    %v388 = vsub.f32 %v387, 1.0
    %v389 = vmul.f32 %v386, %v264
    %391 = vrot.lane.b32.xlu0 %v388, 64
    %v392 = vpop.permute.xlu0 %391
    %v394 = vmul.f32 %v386, %v392
    %396 = vrot.lane.b32.xlu0 %v394, 32
    %v397 = vpop.permute.xlu0 %396
    %v399 = vadd.f32 %v389, %v397
    %v400 = vtanh.pop %v399
    %402 = vrot.lane.b32.xlu0 %v400, 64
    %v403 = vpop.permute.xlu0 %402
    %v405 = vmul.f32 %v386, %v403
    %406 = vset.pattern.permute.xlu0 4
    %407 = vperm.xlu0 %406, %v77
    %v408 = vpop.permute.xlu0 %407
    %v410 = vmul.f32 %v408, %v101
    %v411 = vadd.f32 %v94, %v410
    %412 = vset.pattern.permute.xlu0 5
    %413 = vperm.xlu0 %412, %v77
    %v414 = vpop.permute.xlu0 %413
    %v416 = vmul.f32 %v414, %v103
    %v417 = vadd.f32 %v411, %v416
    %419 = vrot.lane.b32.xlu0 %v341, 32
    %v420 = vpop.permute.xlu0 %419
    %v422 = vsel %vm129, %v420, 0
    %424 = vmatpush.bf16.msra.mxu0 0
    %425 = vmatpush.bf16.msra.mxu0 0
    %426 = vmatpush.bf16.msra.mxu0 0
    %427 = vmatpush.bf16.msra.mxu0 0
    %428 = vmatpush.bf16.msra.mxu0 0
    %429 = vmatpush.bf16.msra.mxu0 0
    %430 = vmatpush.bf16.msra.mxu0 %v126
    %431 = vmatpush.bf16.msra.mxu0 %v125
    %432 = vmatmul.bf16.gmra.mxu0 %v422
    %v433 = vpop.f32.mrf.mxu0
    %v434 = vadd.f32 0.0, %v433
    %v435 = vpop.f32.mrf.mxu0
    %436 = vdwg.mxu0
    %v437 = vadd.f32 %v417, %v434
    %v438 = vxor.u32 %v437, 2147483648
    %v439 = vmul.f32 %v438, 1.442695
    %v440 = vpow.pop %v439
    %v441 = vadd.f32 %v440, 1.0
    %v442 = vrcp.pop %v441
    %v443 = vmul.f32 %v441, %v442
    %v444 = vsub.f32 1.0, %v443
    %v445 = vmul.f32 %v442, %v444
    %v446 = vadd.f32 %v442, %v445
    %vm447 = vweird.f32 %v441
    %vm448 = vweird.f32 %v442
    %vm449 = vmor %vm447, %vm448
    %v450 = vsel %vm449, %v442, %v446
    %v451 = vand.u32 2147483647, %v441
    %vm452 = vcmp.eq.f32.partialorder %v451, 8.507059e+37
    %v453 = vand.u32 %v441, 2147483648
    %v454 = vor.u32 1.1754944e-38, %v453
    %v455 = vsel %vm452, %v454, %v450
    %v456 = vmul.f32 1.0, %v455
    %v457 = vmul.f32 %v456, 2.0
    %v458 = vsub.f32 %v457, 1.0
    %v459 = vmul.f32 %v456, %v334
    %461 = vrot.lane.b32.xlu0 %v458, 64
    %v462 = vpop.permute.xlu0 %461
    %v464 = vmul.f32 %v456, %v462
    %466 = vrot.lane.b32.xlu0 %v464, 32
    %v467 = vpop.permute.xlu0 %466
    %v469 = vadd.f32 %v459, %v467
    %v470 = vtanh.pop %v469
    %472 = vrot.lane.b32.xlu0 %v470, 64
    %v473 = vpop.permute.xlu0 %472
    %v475 = vmul.f32 %v456, %v473
    %v476 = vpack.c.bf16 %v475, %v475
    %478 = vrot.lane.b32.xlu0 %v475, 32
    %v479 = vpop.permute.xlu0 %478
    %482 = vrot.lane.b32.xlu0 %v405, 64
    %v483 = vpop.permute.xlu0 %482
    %v485 = vsel %vm129, %v479, %v483
    %v486 = vpack.c.bf16 %v485, %v485
    %v488 = vsel %vm216, %v486, 0
    %490 = vmatpush.bf16.msra.mxu0 0
    %491 = vmatpush.bf16.msra.mxu0 0
    %492 = vmatpush.bf16.msra.mxu0 0
    %493 = vmatpush.bf16.msra.mxu0 0
    %494 = vmatpush.bf16.msra.mxu0 %v211
    %495 = vmatpush.bf16.msra.mxu0 %v210
    %496 = vmatpush.bf16.msra.mxu0 %v209
    %497 = vmatpush.bf16.msra.mxu0 %v208
    %498 = vmatmul.bf16.gmra.mxu0 %v488
    %v499 = vpop.f32.mrf.mxu0
    %v500 = vadd.f32 %v98, %v499
    %v501 = vpop.f32.mrf.mxu0
    %502 = vdwg.mxu0
    %v503 = vxor.u32 %v500, 2147483648
    %v504 = vmul.f32 %v503, 1.442695
    %v505 = vpow.pop %v504
    %v506 = vadd.f32 %v505, 1.0
    %v507 = vrcp.pop %v506
    %v508 = vmul.f32 %v506, %v507
    %v509 = vsub.f32 1.0, %v508
    %v510 = vmul.f32 %v507, %v509
    %v511 = vadd.f32 %v507, %v510
    %vm512 = vweird.f32 %v506
    %vm513 = vweird.f32 %v507
    %vm514 = vmor %vm512, %vm513
    %v515 = vsel %vm514, %v507, %v511
    %v516 = vand.u32 2147483647, %v506
    %vm517 = vcmp.eq.f32.partialorder %v516, 8.507059e+37
    %v518 = vand.u32 %v506, 2147483648
    %v519 = vor.u32 1.1754944e-38, %v518
    %v520 = vsel %vm517, %v519, %v515
    %v521 = vmul.f32 1.0, %v520
    %v522 = vmul.f32 %v521, 2.0
    %v523 = vsub.f32 %v522, 1.0
    %v524 = vmul.f32 %v521, %v399
    %526 = vrot.lane.b32.xlu0 %v523, 64
    %v527 = vpop.permute.xlu0 %526
    %v529 = vmul.f32 %v521, %v527
    %531 = vrot.lane.b32.xlu0 %v529, 32
    %v532 = vpop.permute.xlu0 %531
    %v534 = vadd.f32 %v524, %v532
    %v535 = vtanh.pop %v534
    %537 = vrot.lane.b32.xlu0 %v535, 64
    %v538 = vpop.permute.xlu0 %537
    %v540 = vmul.f32 %v521, %v538
    %541 = vset.pattern.permute.xlu0 6
    %542 = vperm.xlu0 %541, %v77
    %v543 = vpop.permute.xlu0 %542
    %v545 = vmul.f32 %v543, %v101
    %v546 = vadd.f32 %v94, %v545
    %547 = vset.pattern.permute.xlu0 7
    %548 = vperm.xlu0 %547, %v77
    %v549 = vpop.permute.xlu0 %548
    %v551 = vmul.f32 %v549, %v103
    %v552 = vadd.f32 %v546, %v551
    %554 = vrot.lane.b32.xlu0 %v476, 32
    %v555 = vpop.permute.xlu0 %554
    %v557 = vsel %vm129, %v555, 0
    %559 = vmatpush.bf16.msra.mxu0 0
    %560 = vmatpush.bf16.msra.mxu0 0
    %561 = vmatpush.bf16.msra.mxu0 0
    %562 = vmatpush.bf16.msra.mxu0 0
    %563 = vmatpush.bf16.msra.mxu0 0
    %564 = vmatpush.bf16.msra.mxu0 0
    %565 = vmatpush.bf16.msra.mxu0 %v126
    %566 = vmatpush.bf16.msra.mxu0 %v125
    %567 = vmatmul.bf16.gmra.mxu0 %v557
    %v568 = vpop.f32.mrf.mxu0
    %v569 = vadd.f32 0.0, %v568
    %v570 = vpop.f32.mrf.mxu0
    %571 = vdwg.mxu0
    %v572 = vadd.f32 %v552, %v569
    %v573 = vxor.u32 %v572, 2147483648
    %v574 = vmul.f32 %v573, 1.442695
    %v575 = vpow.pop %v574
    %v576 = vadd.f32 %v575, 1.0
    %v577 = vrcp.pop %v576
    %v578 = vmul.f32 %v576, %v577
    %v579 = vsub.f32 1.0, %v578
    %v580 = vmul.f32 %v577, %v579
    %v581 = vadd.f32 %v577, %v580
    %vm582 = vweird.f32 %v576
    %vm583 = vweird.f32 %v577
    %vm584 = vmor %vm582, %vm583
    %v585 = vsel %vm584, %v577, %v581
    %v586 = vand.u32 2147483647, %v576
    %vm587 = vcmp.eq.f32.partialorder %v586, 8.507059e+37
    %v588 = vand.u32 %v576, 2147483648
    %v589 = vor.u32 1.1754944e-38, %v588
    %v590 = vsel %vm587, %v589, %v585
    %v591 = vmul.f32 1.0, %v590
    %v592 = vmul.f32 %v591, 2.0
    %v593 = vsub.f32 %v592, 1.0
    %v594 = vmul.f32 %v591, %v469
    %596 = vrot.lane.b32.xlu0 %v593, 64
    %v597 = vpop.permute.xlu0 %596
    %v599 = vmul.f32 %v591, %v597
    %601 = vrot.lane.b32.xlu0 %v599, 32
    %v602 = vpop.permute.xlu0 %601
    %v604 = vadd.f32 %v594, %v602
    %v605 = vtanh.pop %v604
    %607 = vrot.lane.b32.xlu0 %v605, 64
    %v608 = vpop.permute.xlu0 %607
    %v610 = vmul.f32 %v591, %v608
    %v611 = vpack.c.bf16 %v610, %v610
    %613 = vrot.lane.b32.xlu0 %v610, 32
    %v614 = vpop.permute.xlu0 %613
    %617 = vrot.lane.b32.xlu0 %v540, 64
    %v618 = vpop.permute.xlu0 %617
    %v620 = vsel %vm129, %v614, %v618
    %v621 = vpack.c.bf16 %v620, %v620
    %v623 = vsel %vm216, %v621, 0
    %625 = vmatpush.bf16.msra.mxu0 0
    %626 = vmatpush.bf16.msra.mxu0 0
    %627 = vmatpush.bf16.msra.mxu0 0
    %628 = vmatpush.bf16.msra.mxu0 0
    %629 = vmatpush.bf16.msra.mxu0 %v211
    %630 = vmatpush.bf16.msra.mxu0 %v210
    %631 = vmatpush.bf16.msra.mxu0 %v209
    %632 = vmatpush.bf16.msra.mxu0 %v208
    %633 = vmatmul.bf16.gmra.mxu0 %v623
    %v634 = vpop.f32.mrf.mxu0
    %v635 = vadd.f32 %v98, %v634
    %v636 = vpop.f32.mrf.mxu0
    %637 = vdwg.mxu0
    %v638 = vxor.u32 %v635, 2147483648
    %v639 = vmul.f32 %v638, 1.442695
    %v640 = vpow.pop %v639
    %v641 = vadd.f32 %v640, 1.0
    %v642 = vrcp.pop %v641
    %v643 = vmul.f32 %v641, %v642
    %v644 = vsub.f32 1.0, %v643
    %v645 = vmul.f32 %v642, %v644
    %v646 = vadd.f32 %v642, %v645
    %vm647 = vweird.f32 %v641
    %vm648 = vweird.f32 %v642
    %vm649 = vmor %vm647, %vm648
    %v650 = vsel %vm649, %v642, %v646
    %v651 = vand.u32 2147483647, %v641
    %vm652 = vcmp.eq.f32.partialorder %v651, 8.507059e+37
    %v653 = vand.u32 %v641, 2147483648
    %v654 = vor.u32 1.1754944e-38, %v653
    %v655 = vsel %vm652, %v654, %v650
    %v656 = vmul.f32 1.0, %v655
    %v657 = vmul.f32 %v656, 2.0
    %v658 = vsub.f32 %v657, 1.0
    %v659 = vmul.f32 %v656, %v534
    %661 = vrot.lane.b32.xlu0 %v658, 64
    %v662 = vpop.permute.xlu0 %661
    %v664 = vmul.f32 %v656, %v662
    %666 = vrot.lane.b32.xlu0 %v664, 32
    %v667 = vpop.permute.xlu0 %666
    %v669 = vadd.f32 %v659, %v667
    %v670 = vtanh.pop %v669
    %672 = vrot.lane.b32.xlu0 %v670, 64
    %v673 = vpop.permute.xlu0 %672
    %v675 = vmul.f32 %v656, %v673
    %676 = vset.pattern.permute.xlu0 8
    %677 = vperm.xlu0 %676, %v77
    %v678 = vpop.permute.xlu0 %677
    %v680 = vmul.f32 %v678, %v101
    %v681 = vadd.f32 %v94, %v680
    %682 = vset.pattern.permute.xlu0 9
    %683 = vperm.xlu0 %682, %v77
    %v684 = vpop.permute.xlu0 %683
    %v686 = vmul.f32 %v684, %v103
    %v687 = vadd.f32 %v681, %v686
    %689 = vrot.lane.b32.xlu0 %v611, 32
    %v690 = vpop.permute.xlu0 %689
    %v692 = vsel %vm129, %v690, 0
    %694 = vmatpush.bf16.msra.mxu0 0
    %695 = vmatpush.bf16.msra.mxu0 0
    %696 = vmatpush.bf16.msra.mxu0 0
    %697 = vmatpush.bf16.msra.mxu0 0
    %698 = vmatpush.bf16.msra.mxu0 0
    %699 = vmatpush.bf16.msra.mxu0 0
    %700 = vmatpush.bf16.msra.mxu0 %v126
    %701 = vmatpush.bf16.msra.mxu0 %v125
    %702 = vmatmul.bf16.gmra.mxu0 %v692
    %v703 = vpop.f32.mrf.mxu0
    %v704 = vadd.f32 0.0, %v703
    %v705 = vpop.f32.mrf.mxu0
    %706 = vdwg.mxu0
    %v707 = vadd.f32 %v687, %v704
    %v708 = vxor.u32 %v707, 2147483648
    %v709 = vmul.f32 %v708, 1.442695
    %v710 = vpow.pop %v709
    %v711 = vadd.f32 %v710, 1.0
    %v712 = vrcp.pop %v711
    %v713 = vmul.f32 %v711, %v712
    %v714 = vsub.f32 1.0, %v713
    %v715 = vmul.f32 %v712, %v714
    %v716 = vadd.f32 %v712, %v715
    %vm717 = vweird.f32 %v711
    %vm718 = vweird.f32 %v712
    %vm719 = vmor %vm717, %vm718
    %v720 = vsel %vm719, %v712, %v716
    %v721 = vand.u32 2147483647, %v711
    %vm722 = vcmp.eq.f32.partialorder %v721, 8.507059e+37
    %v723 = vand.u32 %v711, 2147483648
    %v724 = vor.u32 1.1754944e-38, %v723
    %v725 = vsel %vm722, %v724, %v720
    %v726 = vmul.f32 1.0, %v725
    %v727 = vmul.f32 %v726, 2.0
    %v728 = vsub.f32 %v727, 1.0
    %v729 = vmul.f32 %v726, %v604
    %731 = vrot.lane.b32.xlu0 %v728, 64
    %v732 = vpop.permute.xlu0 %731
    %v734 = vmul.f32 %v726, %v732
    %736 = vrot.lane.b32.xlu0 %v734, 32
    %v737 = vpop.permute.xlu0 %736
    %v739 = vadd.f32 %v729, %v737
    %v740 = vtanh.pop %v739
    %742 = vrot.lane.b32.xlu0 %v740, 64
    %v743 = vpop.permute.xlu0 %742
    %v745 = vmul.f32 %v726, %v743
    %v746 = vpack.c.bf16 %v745, %v745
    %748 = vrot.lane.b32.xlu0 %v745, 32
    %v749 = vpop.permute.xlu0 %748
    %752 = vrot.lane.b32.xlu0 %v675, 64
    %v753 = vpop.permute.xlu0 %752
    %v755 = vsel %vm129, %v749, %v753
    %v756 = vpack.c.bf16 %v755, %v755
    %v758 = vsel %vm216, %v756, 0
    %760 = vmatpush.bf16.msra.mxu0 0
    %761 = vmatpush.bf16.msra.mxu0 0
    %762 = vmatpush.bf16.msra.mxu0 0
    %763 = vmatpush.bf16.msra.mxu0 0
    %764 = vmatpush.bf16.msra.mxu0 %v211
    %765 = vmatpush.bf16.msra.mxu0 %v210
    %766 = vmatpush.bf16.msra.mxu0 %v209
    %767 = vmatpush.bf16.msra.mxu0 %v208
    %768 = vmatmul.bf16.gmra.mxu0 %v758
    %v769 = vpop.f32.mrf.mxu0
    %v770 = vadd.f32 %v98, %v769
    %v771 = vpop.f32.mrf.mxu0
    %772 = vdwg.mxu0
    %v773 = vxor.u32 %v770, 2147483648
    %v774 = vmul.f32 %v773, 1.442695
    %v775 = vpow.pop %v774
    %v776 = vadd.f32 %v775, 1.0
    %v777 = vrcp.pop %v776
    %v778 = vmul.f32 %v776, %v777
    %v779 = vsub.f32 1.0, %v778
    %v780 = vmul.f32 %v777, %v779
    %v781 = vadd.f32 %v777, %v780
    %vm782 = vweird.f32 %v776
    %vm783 = vweird.f32 %v777
    %vm784 = vmor %vm782, %vm783
    %v785 = vsel %vm784, %v777, %v781
    %v786 = vand.u32 2147483647, %v776
    %vm787 = vcmp.eq.f32.partialorder %v786, 8.507059e+37
    %v788 = vand.u32 %v776, 2147483648
    %v789 = vor.u32 1.1754944e-38, %v788
    %v790 = vsel %vm787, %v789, %v785
    %v791 = vmul.f32 1.0, %v790
    %v792 = vmul.f32 %v791, 2.0
    %v793 = vsub.f32 %v792, 1.0
    %v794 = vmul.f32 %v791, %v669
    %796 = vrot.lane.b32.xlu0 %v793, 64
    %v797 = vpop.permute.xlu0 %796
    %v799 = vmul.f32 %v791, %v797
    %801 = vrot.lane.b32.xlu0 %v799, 32
    %v802 = vpop.permute.xlu0 %801
    %v804 = vadd.f32 %v794, %v802
    %v805 = vtanh.pop %v804
    %807 = vrot.lane.b32.xlu0 %v805, 64
    %v808 = vpop.permute.xlu0 %807
    %v810 = vmul.f32 %v791, %v808
    %811 = vset.pattern.permute.xlu0 10
    %812 = vperm.xlu0 %811, %v77
    %v813 = vpop.permute.xlu0 %812
    %v815 = vmul.f32 %v813, %v101
    %v816 = vadd.f32 %v94, %v815
    %817 = vset.pattern.permute.xlu0 11
    %818 = vperm.xlu0 %817, %v77
    %v819 = vpop.permute.xlu0 %818
    %v821 = vmul.f32 %v819, %v103
    %v822 = vadd.f32 %v816, %v821
    %824 = vrot.lane.b32.xlu0 %v746, 32
    %v825 = vpop.permute.xlu0 %824
    %v827 = vsel %vm129, %v825, 0
    %829 = vmatpush.bf16.msra.mxu0 0
    %830 = vmatpush.bf16.msra.mxu0 0
    %831 = vmatpush.bf16.msra.mxu0 0
    %832 = vmatpush.bf16.msra.mxu0 0
    %833 = vmatpush.bf16.msra.mxu0 0
    %834 = vmatpush.bf16.msra.mxu0 0
    %835 = vmatpush.bf16.msra.mxu0 %v126
    %836 = vmatpush.bf16.msra.mxu0 %v125
    %837 = vmatmul.bf16.gmra.mxu0 %v827
    %v838 = vpop.f32.mrf.mxu0
    %v839 = vadd.f32 0.0, %v838
    %v840 = vpop.f32.mrf.mxu0
    %841 = vdwg.mxu0
    %v842 = vadd.f32 %v822, %v839
    %v843 = vxor.u32 %v842, 2147483648
    %v844 = vmul.f32 %v843, 1.442695
    %v845 = vpow.pop %v844
    %v846 = vadd.f32 %v845, 1.0
    %v847 = vrcp.pop %v846
    %v848 = vmul.f32 %v846, %v847
    %v849 = vsub.f32 1.0, %v848
    %v850 = vmul.f32 %v847, %v849
    %v851 = vadd.f32 %v847, %v850
    %vm852 = vweird.f32 %v846
    %vm853 = vweird.f32 %v847
    %vm854 = vmor %vm852, %vm853
    %v855 = vsel %vm854, %v847, %v851
    %v856 = vand.u32 2147483647, %v846
    %vm857 = vcmp.eq.f32.partialorder %v856, 8.507059e+37
    %v858 = vand.u32 %v846, 2147483648
    %v859 = vor.u32 1.1754944e-38, %v858
    %v860 = vsel %vm857, %v859, %v855
    %v861 = vmul.f32 1.0, %v860
    %v862 = vmul.f32 %v861, 2.0
    %v863 = vsub.f32 %v862, 1.0
    %v864 = vmul.f32 %v861, %v739
    %866 = vrot.lane.b32.xlu0 %v863, 64
    %v867 = vpop.permute.xlu0 %866
    %v869 = vmul.f32 %v861, %v867
    %871 = vrot.lane.b32.xlu0 %v869, 32
    %v872 = vpop.permute.xlu0 %871
    %v874 = vadd.f32 %v864, %v872
    %v875 = vtanh.pop %v874
    %877 = vrot.lane.b32.xlu0 %v875, 64
    %v878 = vpop.permute.xlu0 %877
    %v880 = vmul.f32 %v861, %v878
    %v881 = vpack.c.bf16 %v880, %v880
    %883 = vrot.lane.b32.xlu0 %v880, 32
    %v884 = vpop.permute.xlu0 %883
    %887 = vrot.lane.b32.xlu0 %v810, 64
    %v888 = vpop.permute.xlu0 %887
    %v890 = vsel %vm129, %v884, %v888
    %v891 = vpack.c.bf16 %v890, %v890
    %v893 = vsel %vm216, %v891, 0
    %895 = vmatpush.bf16.msra.mxu0 0
    %896 = vmatpush.bf16.msra.mxu0 0
    %897 = vmatpush.bf16.msra.mxu0 0
    %898 = vmatpush.bf16.msra.mxu0 0
    %899 = vmatpush.bf16.msra.mxu0 %v211
    %900 = vmatpush.bf16.msra.mxu0 %v210
    %901 = vmatpush.bf16.msra.mxu0 %v209
    %902 = vmatpush.bf16.msra.mxu0 %v208
    %903 = vmatmul.bf16.gmra.mxu0 %v893
    %v904 = vpop.f32.mrf.mxu0
    %v905 = vadd.f32 %v98, %v904
    %v906 = vpop.f32.mrf.mxu0
    %907 = vdwg.mxu0
    %v908 = vxor.u32 %v905, 2147483648
    %v909 = vmul.f32 %v908, 1.442695
    %v910 = vpow.pop %v909
    %v911 = vadd.f32 %v910, 1.0
    %v912 = vrcp.pop %v911
    %v913 = vmul.f32 %v911, %v912
    %v914 = vsub.f32 1.0, %v913
    %v915 = vmul.f32 %v912, %v914
    %v916 = vadd.f32 %v912, %v915
    %vm917 = vweird.f32 %v911
    %vm918 = vweird.f32 %v912
    %vm919 = vmor %vm917, %vm918
    %v920 = vsel %vm919, %v912, %v916
    %v921 = vand.u32 2147483647, %v911
    %vm922 = vcmp.eq.f32.partialorder %v921, 8.507059e+37
    %v923 = vand.u32 %v911, 2147483648
    %v924 = vor.u32 1.1754944e-38, %v923
    %v925 = vsel %vm922, %v924, %v920
    %v926 = vmul.f32 1.0, %v925
    %v927 = vmul.f32 %v926, 2.0
    %v928 = vsub.f32 %v927, 1.0
    %v929 = vmul.f32 %v926, %v804
    %931 = vrot.lane.b32.xlu0 %v928, 64
    %v932 = vpop.permute.xlu0 %931
    %v934 = vmul.f32 %v926, %v932
    %936 = vrot.lane.b32.xlu0 %v934, 32
    %v937 = vpop.permute.xlu0 %936
    %v939 = vadd.f32 %v929, %v937
    %v940 = vtanh.pop %v939
    %942 = vrot.lane.b32.xlu0 %v940, 64
    %v943 = vpop.permute.xlu0 %942
    %v945 = vmul.f32 %v926, %v943
    %946 = vset.pattern.permute.xlu0 12
    %947 = vperm.xlu0 %946, %v77
    %v948 = vpop.permute.xlu0 %947
    %v950 = vmul.f32 %v948, %v101
    %v951 = vadd.f32 %v94, %v950
    %952 = vset.pattern.permute.xlu0 13
    %953 = vperm.xlu0 %952, %v77
    %v954 = vpop.permute.xlu0 %953
    %v956 = vmul.f32 %v954, %v103
    %v957 = vadd.f32 %v951, %v956
    %959 = vrot.lane.b32.xlu0 %v881, 32
    %v960 = vpop.permute.xlu0 %959
    %v962 = vsel %vm129, %v960, 0
    %964 = vmatpush.bf16.msra.mxu0 0
    %965 = vmatpush.bf16.msra.mxu0 0
    %966 = vmatpush.bf16.msra.mxu0 0
    %967 = vmatpush.bf16.msra.mxu0 0
    %968 = vmatpush.bf16.msra.mxu0 0
    %969 = vmatpush.bf16.msra.mxu0 0
    %970 = vmatpush.bf16.msra.mxu0 %v126
    %971 = vmatpush.bf16.msra.mxu0 %v125
    %972 = vmatmul.bf16.gmra.mxu0 %v962
    %v973 = vpop.f32.mrf.mxu0
    %v974 = vadd.f32 0.0, %v973
    %v975 = vpop.f32.mrf.mxu0
    %976 = vdwg.mxu0
    %v977 = vadd.f32 %v957, %v974
    %v978 = vxor.u32 %v977, 2147483648
    %v979 = vmul.f32 %v978, 1.442695
    %v980 = vpow.pop %v979
    %v981 = vadd.f32 %v980, 1.0
    %v982 = vrcp.pop %v981
    %v983 = vmul.f32 %v981, %v982
    %v984 = vsub.f32 1.0, %v983
    %v985 = vmul.f32 %v982, %v984
    %v986 = vadd.f32 %v982, %v985
    %vm987 = vweird.f32 %v981
    %vm988 = vweird.f32 %v982
    %vm989 = vmor %vm987, %vm988
    %v990 = vsel %vm989, %v982, %v986
    %v991 = vand.u32 2147483647, %v981
    %vm992 = vcmp.eq.f32.partialorder %v991, 8.507059e+37
    %v993 = vand.u32 %v981, 2147483648
    %v994 = vor.u32 1.1754944e-38, %v993
    %v995 = vsel %vm992, %v994, %v990
    %v996 = vmul.f32 1.0, %v995
    %v997 = vmul.f32 %v996, 2.0
    %v998 = vsub.f32 %v997, 1.0
    %v999 = vmul.f32 %v996, %v874
    %1001 = vrot.lane.b32.xlu0 %v998, 64
    %v1002 = vpop.permute.xlu0 %1001
    %v1004 = vmul.f32 %v996, %v1002
    %1006 = vrot.lane.b32.xlu0 %v1004, 32
    %v1007 = vpop.permute.xlu0 %1006
    %v1009 = vadd.f32 %v999, %v1007
    %v1010 = vtanh.pop %v1009
    %1012 = vrot.lane.b32.xlu0 %v1010, 64
    %v1013 = vpop.permute.xlu0 %1012
    %v1015 = vmul.f32 %v996, %v1013
    %v1016 = vpack.c.bf16 %v1015, %v1015
    %1018 = vrot.lane.b32.xlu0 %v1015, 32
    %v1019 = vpop.permute.xlu0 %1018
    %1022 = vrot.lane.b32.xlu0 %v945, 64
    %v1023 = vpop.permute.xlu0 %1022
    %v1025 = vsel %vm129, %v1019, %v1023
    %v1026 = vpack.c.bf16 %v1025, %v1025
    %v1028 = vsel %vm216, %v1026, 0
    %1030 = vmatpush.bf16.msra.mxu0 0
    %1031 = vmatpush.bf16.msra.mxu0 0
    %1032 = vmatpush.bf16.msra.mxu0 0
    %1033 = vmatpush.bf16.msra.mxu0 0
    %1034 = vmatpush.bf16.msra.mxu0 %v211
    %1035 = vmatpush.bf16.msra.mxu0 %v210
    %1036 = vmatpush.bf16.msra.mxu0 %v209
    %1037 = vmatpush.bf16.msra.mxu0 %v208
    %1038 = vmatmul.bf16.gmra.mxu0 %v1028
    %v1039 = vpop.f32.mrf.mxu0
    %v1040 = vadd.f32 %v98, %v1039
    %v1041 = vpop.f32.mrf.mxu0
    %1042 = vdwg.mxu0
    %v1043 = vxor.u32 %v1040, 2147483648
    %v1044 = vmul.f32 %v1043, 1.442695
    %v1045 = vpow.pop %v1044
    %v1046 = vadd.f32 %v1045, 1.0
    %v1047 = vrcp.pop %v1046
    %v1048 = vmul.f32 %v1046, %v1047
    %v1049 = vsub.f32 1.0, %v1048
    %v1050 = vmul.f32 %v1047, %v1049
    %v1051 = vadd.f32 %v1047, %v1050
    %vm1052 = vweird.f32 %v1046
    %vm1053 = vweird.f32 %v1047
    %vm1054 = vmor %vm1052, %vm1053
    %v1055 = vsel %vm1054, %v1047, %v1051
    %v1056 = vand.u32 2147483647, %v1046
    %vm1057 = vcmp.eq.f32.partialorder %v1056, 8.507059e+37
    %v1058 = vand.u32 %v1046, 2147483648
    %v1059 = vor.u32 1.1754944e-38, %v1058
    %v1060 = vsel %vm1057, %v1059, %v1055
    %v1061 = vmul.f32 1.0, %v1060
    %v1062 = vmul.f32 %v1061, 2.0
    %v1063 = vsub.f32 %v1062, 1.0
    %v1064 = vmul.f32 %v1061, %v939
    %1066 = vrot.lane.b32.xlu0 %v1063, 64
    %v1067 = vpop.permute.xlu0 %1066
    %v1069 = vmul.f32 %v1061, %v1067
    %1071 = vrot.lane.b32.xlu0 %v1069, 32
    %v1072 = vpop.permute.xlu0 %1071
    %v1074 = vadd.f32 %v1064, %v1072
    %v1075 = vtanh.pop %v1074
    %1077 = vrot.lane.b32.xlu0 %v1075, 64
    %v1078 = vpop.permute.xlu0 %1077
    %v1080 = vmul.f32 %v1061, %v1078
    %1081 = vset.pattern.permute.xlu0 14
    %1082 = vperm.xlu0 %1081, %v77
    %v1083 = vpop.permute.xlu0 %1082
    %v1085 = vmul.f32 %v1083, %v101
    %v1086 = vadd.f32 %v94, %v1085
    %1087 = vset.pattern.permute.xlu0 15
    %1088 = vperm.xlu0 %1087, %v77
    %v1089 = vpop.permute.xlu0 %1088
    %v1091 = vmul.f32 %v1089, %v103
    %v1092 = vadd.f32 %v1086, %v1091
    %1094 = vrot.lane.b32.xlu0 %v1016, 32
    %v1095 = vpop.permute.xlu0 %1094
    %v1097 = vsel %vm129, %v1095, 0
    %1099 = vmatpush.bf16.msra.mxu0 0
    %1100 = vmatpush.bf16.msra.mxu0 0
    %1101 = vmatpush.bf16.msra.mxu0 0
    %1102 = vmatpush.bf16.msra.mxu0 0
    %1103 = vmatpush.bf16.msra.mxu0 0
    %1104 = vmatpush.bf16.msra.mxu0 0
    %1105 = vmatpush.bf16.msra.mxu0 %v126
    %1106 = vmatpush.bf16.msra.mxu0 %v125
    %1107 = vmatmul.bf16.gmra.mxu0 %v1097
    %v1108 = vpop.f32.mrf.mxu0
    %v1109 = vadd.f32 0.0, %v1108
    %v1110 = vpop.f32.mrf.mxu0
    %1111 = vdwg.mxu0
    %v1112 = vadd.f32 %v1092, %v1109
    %v1113 = vxor.u32 %v1112, 2147483648
    %v1114 = vmul.f32 %v1113, 1.442695
    %v1115 = vpow.pop %v1114
    %v1116 = vadd.f32 %v1115, 1.0
    %v1117 = vrcp.pop %v1116
    %v1118 = vmul.f32 %v1116, %v1117
    %v1119 = vsub.f32 1.0, %v1118
    %v1120 = vmul.f32 %v1117, %v1119
    %v1121 = vadd.f32 %v1117, %v1120
    %vm1122 = vweird.f32 %v1116
    %vm1123 = vweird.f32 %v1117
    %vm1124 = vmor %vm1122, %vm1123
    %v1125 = vsel %vm1124, %v1117, %v1121
    %v1126 = vand.u32 2147483647, %v1116
    %vm1127 = vcmp.eq.f32.partialorder %v1126, 8.507059e+37
    %v1128 = vand.u32 %v1116, 2147483648
    %v1129 = vor.u32 1.1754944e-38, %v1128
    %v1130 = vsel %vm1127, %v1129, %v1125
    %v1131 = vmul.f32 1.0, %v1130
    %v1132 = vmul.f32 %v1131, 2.0
    %v1133 = vsub.f32 %v1132, 1.0
    %v1134 = vmul.f32 %v1131, %v1009
    %1136 = vrot.lane.b32.xlu0 %v1133, 64
    %v1137 = vpop.permute.xlu0 %1136
    %v1139 = vmul.f32 %v1131, %v1137
    %1141 = vrot.lane.b32.xlu0 %v1139, 32
    %v1142 = vpop.permute.xlu0 %1141
    %v1144 = vadd.f32 %v1134, %v1142
    %v1145 = vtanh.pop %v1144
    %1147 = vrot.lane.b32.xlu0 %v1145, 64
    %v1148 = vpop.permute.xlu0 %1147
    %v1150 = vmul.f32 %v1131, %v1148
    %1152 = vrot.lane.b32.xlu0 %v1150, 32
    %v1153 = vpop.permute.xlu0 %1152
    %1156 = vrot.lane.b32.xlu0 %v1080, 64
    %v1157 = vpop.permute.xlu0 %1156
    %v1159 = vsel %vm129, %v1153, %v1157
    %v1160 = vpack.c.bf16 %v1159, %v1159
    %v1162 = vsel %vm216, %v1160, 0
    %1164 = vmatpush.bf16.msra.mxu0 0
    %1165 = vmatpush.bf16.msra.mxu0 0
    %1166 = vmatpush.bf16.msra.mxu0 0
    %1167 = vmatpush.bf16.msra.mxu0 0
    %1168 = vmatpush.bf16.msra.mxu0 %v211
    %1169 = vmatpush.bf16.msra.mxu0 %v210
    %1170 = vmatpush.bf16.msra.mxu0 %v209
    %1171 = vmatpush.bf16.msra.mxu0 %v208
    %1172 = vmatmul.bf16.gmra.mxu0 %v1162
    %v1173 = vpop.f32.mrf.mxu0
    %v1174 = vadd.f32 %v98, %v1173
    %v1175 = vpop.f32.mrf.mxu0
    %1176 = vdwg.mxu0
    %v1177 = vxor.u32 %v1174, 2147483648
    %v1178 = vmul.f32 %v1177, 1.442695
    %v1179 = vpow.pop %v1178
    %v1180 = vadd.f32 %v1179, 1.0
    %v1181 = vrcp.pop %v1180
    %v1182 = vmul.f32 %v1180, %v1181
    %v1183 = vsub.f32 1.0, %v1182
    %v1184 = vmul.f32 %v1181, %v1183
    %v1185 = vadd.f32 %v1181, %v1184
    %vm1186 = vweird.f32 %v1180
    %vm1187 = vweird.f32 %v1181
    %vm1188 = vmor %vm1186, %vm1187
    %v1189 = vsel %vm1188, %v1181, %v1185
    %v1190 = vand.u32 2147483647, %v1180
    %vm1191 = vcmp.eq.f32.partialorder %v1190, 8.507059e+37
    %v1192 = vand.u32 %v1180, 2147483648
    %v1193 = vor.u32 1.1754944e-38, %v1192
    %v1194 = vsel %vm1191, %v1193, %v1189
    %v1195 = vmul.f32 1.0, %v1194
    %v1196 = vmul.f32 %v1195, 2.0
    %v1197 = vsub.f32 %v1196, 1.0
    %v1198 = vmul.f32 %v1195, %v1074
    %1200 = vrot.lane.b32.xlu0 %v1197, 64
    %v1201 = vpop.permute.xlu0 %1200
    %v1203 = vmul.f32 %v1195, %v1201
    %1205 = vrot.lane.b32.xlu0 %v1203, 32
    %v1206 = vpop.permute.xlu0 %1205
    %v1208 = vadd.f32 %v1198, %v1206
    %v1209 = vtanh.pop %v1208
    %1211 = vrot.lane.b32.xlu0 %v1209, 64
    %v1212 = vpop.permute.xlu0 %1211
    %v1214 = vmul.f32 %v1195, %v1212
    %v1216 = vperm.slane %v90, 0
    %1217 = vrot.lane.b32.xlu0 %v1216, 96
    %v1218 = vpop.permute.xlu0 %1217
    %v1220 = vmul.f32 %v1214, %v1218
    %1222 = vrot.lane.b32.xlu0 %v1220, 32
    %v1223 = vpop.permute.xlu0 %1222
    %vm1225 = vcmask 254976
    %v1226 = vsel %vm1225, %v1223, 0.0
    %1227 = vadd.xlane.f32.xlu0 %v1226
    %v1228 = vpop.xlane.xlu0 %1227
    %v1230 = vperm.slane %v91, 0
    %v1232 = vadd.f32 %v1228, %v1230
    %vm1233 = vcmask 1024
    %1234 = vst.msk [vmem:[%s8] sm:$0x3] %vm1233, %v1232
    // Predicated region
    $region46: #{tpu_custom_call.1} parent=1 // pred_check
      _
    $region47: #{tpu_custom_call.1} parent=1 // pred_check_branch
      %1236 = sbr.rel (0) target = $region49
    $region48: #{tpu_custom_call.1} parent=1 // pred_region
      _
    $region49: #{tpu_custom_call.1} parent=1 // pred_fallthru
      _
    // Predicated region
    $region50: #{tpu_custom_call.1} parent=1 // pred_check
      _
    $region51: #{tpu_custom_call.1} parent=1 // pred_check_branch
      %1238 = sbr.rel (0) target = $region53
    $region52: #{tpu_custom_call.1} parent=1 // pred_region
      _
    $region53: #{tpu_custom_call.1} parent=1 // pred_fallthru
      _
    %1239 = vsyncpa [#allocation4], 1
    %1240 = vsyncpa [#allocation6], 1

</llo_original>
